<compile_context>
chip_gen: v7x
topology: tpu7x:2x2x1
jax: 0.10.0
libtpu: 0.0.40
codegen_flags: <defaults>
</compile_context>

<pallas_src>
import functools
import math

import jax
import jax.numpy as jnp
from jax.experimental import pallas as pl
from jax.experimental.pallas import tpu as pltpu

EPS = 1e-5
INV_SQRT2 = 0.7071067811865476
LANE = 128

# Set to jnp.bfloat16 to feed the v5e/v6e/v7x MXU at native bf16 rate (f32 accumulate).
# Default f32 keeps bit-level parity with the PyTorch reference at these tiny shapes.
MATMUL_DTYPE = jnp.float32


def _round_up(n, m):
    return ((n + m - 1) // m) * m


# ----------------------------- in-kernel helpers -----------------------------

def _gelu(x):
    # exact GELU: 0.5 * x * (1 + erf(x / sqrt(2)))  (erf sits on the EUP slot)
    return 0.5 * x * (1.0 + jax.lax.erf(x * INV_SQRT2))


def _bn_train(y):
    # BatchNorm1d training-mode forward: batch mean, biased batch variance,
    # gamma=1, beta=0.  axis=0 reduction is sublane/XLU work, off the VALU slot.
    mean = jnp.mean(y, axis=0, keepdims=True)
    var = jnp.mean((y - mean) ** 2, axis=0, keepdims=True)
    return (y - mean) * jax.lax.rsqrt(var + EPS)


def _linear(h, w_ref, b_ref):
    return (
        jnp.dot(
            h.astype(MATMUL_DTYPE),
            w_ref[...].astype(MATMUL_DTYPE),
            preferred_element_type=jnp.float32,
        )
        + b_ref[...]
    )


# --------------------------------- fused kernel --------------------------------

def _fused_kernel(n_res_blocks, n_mid, x_ref, *refs):
    """Entire ImprovedDNN forward in one kernel body (fully unrolled)."""
    o_ref = refs[-1]
    wb = refs[:-1]
    idx = 0

    def nxt():
        nonlocal idx
        w, b = wb[idx], wb[idx + 1]
        idx += 2
        return w, b

    h = x_ref[...]

    # first: Linear -> BN -> GELU
    w, b = nxt()
    h = _gelu(_bn_train(_linear(h, w, b)))

    # ResBlocks: GELU(h + BN(L2(GELU(BN(L1(h))))))
    for _ in range(n_res_blocks):
        w1, b1 = nxt()
        w2, b2 = nxt()
        inner = _gelu(_bn_train(_linear(h, w1, b1)))
        h = _gelu(h + _bn_train(_linear(inner, w2, b2)))

    # middle Linear -> BN -> GELU stack
    for _ in range(n_mid):
        w, b = nxt()
        h = _gelu(_bn_train(_linear(h, w, b)))

    # final Linear
    w, b = nxt()
    o_ref[...] = _linear(h, w, b)


# ------------------------------ pallas_call glue --------------------------------

def _full_spec(shape):
    nd = len(shape)
    return pl.BlockSpec(shape, lambda *_: (0,) * nd)


def improved_dnn_forward(x, params, out_dim):
    """Runs the fused kernel on lane-padded inputs, slices real columns on the way out."""
    B, Din = x.shape
    Din_pad = params["first_w"].shape[0]
    Dout_pad = params["out_w"].shape[1]

    # zero-pad input features to the padded width (padding is along lanes, not batch,
    # so BatchNorm batch statistics are unaffected)
    x_pad = jnp.pad(x, ((0, 0), (0, Din_pad - Din)))

    flat = [params["first_w"], params["first_b"]]
    for (w1, b1, w2, b2) in params["res_blocks"]:
        flat += [w1, b1, w2, b2]
    for (w, b) in params["mid"]:
        flat += [w, b]
    flat += [params["out_w"], params["out_b"]]

    kernel = functools.partial(
        _fused_kernel, len(params["res_blocks"]), len(params["mid"])
    )

    out_pad = pl.pallas_call(
        kernel,
        out_shape=jax.ShapeDtypeStruct((B, Dout_pad), jnp.float32),
        grid=(1,),
        in_specs=[_full_spec(x_pad.shape)] + [_full_spec(a.shape) for a in flat],
        out_specs=_full_spec((B, Dout_pad)),
        compiler_params=pltpu.CompilerParams(
            dimension_semantics=("arbitrary",),
            vmem_limit_bytes=64 * 1024 * 1024,
        ),
    )(x_pad, *flat)

    return out_pad[:, :out_dim]


# ------------------------------ parameter init --------------------------------

def _xavier_uniform(key, din, dout):
    bound = math.sqrt(6.0 / (din + dout))
    return jax.random.uniform(key, (din, dout), jnp.float32, -bound, bound)


def init_params(key, layers, n_res_blocks=3):
    """Deterministic init mirroring ImprovedDNN.__init__ + _init_weights.

    Weights/biases are stored lane-padded (feature dims rounded up to 128);
    padding rows/columns are zero, which keeps padded activation columns at 0.
    """
    n_mid = max(0, len(layers) - 3)
    n_keys = 1 + 2 * n_res_blocks + n_mid + 1
    keys = iter(jax.random.split(key, n_keys))

    def make_linear(din, dout):
        w = _xavier_uniform(next(keys), din, dout)
        w_pad = jnp.pad(
            w, ((0, _round_up(din, LANE) - din), (0, _round_up(dout, LANE) - dout))
        )
        b_pad = jnp.zeros((1, _round_up(dout, LANE)), jnp.float32)
        return w_pad, b_pad

    params = {}
    # first: Linear(layers[0], layers[1]) + BN + GELU
    params["first_w"], params["first_b"] = make_linear(layers[0], layers[1])

    # n_res_blocks ResBlocks at mid_dim = layers[1]
    mid_dim = layers[1]
    res = []
    for _ in range(n_res_blocks):
        w1, b1 = make_linear(mid_dim, mid_dim)
        w2, b2 = make_linear(mid_dim, mid_dim)
        res.append((w1, b1, w2, b2))
    params["res_blocks"] = res

    # middle stack: Linear(layers[i], layers[i+1]) + BN + GELU  for i in 1..len(layers)-3
    mids = []
    for i in range(1, len(layers) - 2):
        mids.append(make_linear(layers[i], layers[i + 1]))
    params["mid"] = mids

    # final Linear(layers[-2], layers[-1])
    params["out_w"], params["out_b"] = make_linear(layers[-2], layers[-1])
    return params


# ----------------------------------- main --------------------------------------

if __name__ == "__main__":
    layers = [16, 32, 32, 8]   # layers[0]=in, hidden=32, out=8
    n_res_blocks = 3
    batch = 8

    key = jax.random.PRNGKey(0)
    pkey, xkey = jax.random.split(key)
    params = init_params(pkey, layers, n_res_blocks=n_res_blocks)

    x = jax.random.normal(xkey, (batch, layers[0]), dtype=jnp.float32)

    fwd = jax.jit(improved_dnn_forward, static_argnums=2)
    out = fwd(x, params, layers[-1])
    out = jax.block_until_ready(out)

    assert out.shape == (batch, layers[-1]), out.shape
    assert bool(jnp.all(jnp.isfinite(out)))
    print("KERNEL_OK")
</pallas_src>

<mosaic_0001>
module attributes {stable_mosaic.version = 11 : i64} {
  func.func @_fused_kernel(%arg0: i32, %arg1: memref<8x128xf32, #tpu.memory_space<vmem>>, %arg2: memref<128x128xf32, #tpu.memory_space<vmem>>, %arg3: memref<1x128xf32, #tpu.memory_space<vmem>>, %arg4: memref<128x128xf32, #tpu.memory_space<vmem>>, %arg5: memref<1x128xf32, #tpu.memory_space<vmem>>, %arg6: memref<128x128xf32, #tpu.memory_space<vmem>>, %arg7: memref<1x128xf32, #tpu.memory_space<vmem>>, %arg8: memref<128x128xf32, #tpu.memory_space<vmem>>, %arg9: memref<1x128xf32, #tpu.memory_space<vmem>>, %arg10: memref<128x128xf32, #tpu.memory_space<vmem>>, %arg11: memref<1x128xf32, #tpu.memory_space<vmem>>, %arg12: memref<128x128xf32, #tpu.memory_space<vmem>>, %arg13: memref<1x128xf32, #tpu.memory_space<vmem>>, %arg14: memref<128x128xf32, #tpu.memory_space<vmem>>, %arg15: memref<1x128xf32, #tpu.memory_space<vmem>>, %arg16: memref<128x128xf32, #tpu.memory_space<vmem>>, %arg17: memref<1x128xf32, #tpu.memory_space<vmem>>, %arg18: memref<128x128xf32, #tpu.memory_space<vmem>>, %arg19: memref<1x128xf32, #tpu.memory_space<vmem>>, %arg20: memref<8x128xf32, #tpu.memory_space<vmem>>) attributes {dimension_semantics = [#tpu.dimension_semantics<arbitrary>], iteration_bounds = array<i64: 1>, scalar_prefetch = 0 : i64, scratch_operands = 0 : i64, tpu.core_type = #tpu.core_type<tc>, window_params = [{pipeline_mode = #tpu.pipeline_mode<synchronous>, transform_indices = @transform_0, window_bounds = array<i64: 8, 128>}, {pipeline_mode = #tpu.pipeline_mode<synchronous>, transform_indices = @transform_1, window_bounds = array<i64: 128, 128>}, {pipeline_mode = #tpu.pipeline_mode<synchronous>, transform_indices = @transform_2, window_bounds = array<i64: 1, 128>}, {pipeline_mode = #tpu.pipeline_mode<synchronous>, transform_indices = @transform_3, window_bounds = array<i64: 128, 128>}, {pipeline_mode = #tpu.pipeline_mode<synchronous>, transform_indices = @transform_4, window_bounds = array<i64: 1, 128>}, {pipeline_mode = #tpu.pipeline_mode<synchronous>, transform_indices = @transform_5, window_bounds = array<i64: 128, 128>}, {pipeline_mode = #tpu.pipeline_mode<synchronous>, transform_indices = @transform_6, window_bounds = array<i64: 1, 128>}, {pipeline_mode = #tpu.pipeline_mode<synchronous>, transform_indices = @transform_7, window_bounds = array<i64: 128, 128>}, {pipeline_mode = #tpu.pipeline_mode<synchronous>, transform_indices = @transform_8, window_bounds = array<i64: 1, 128>}, {pipeline_mode = #tpu.pipeline_mode<synchronous>, transform_indices = @transform_9, window_bounds = array<i64: 128, 128>}, {pipeline_mode = #tpu.pipeline_mode<synchronous>, transform_indices = @transform_10, window_bounds = array<i64: 1, 128>}, {pipeline_mode = #tpu.pipeline_mode<synchronous>, transform_indices = @transform_11, window_bounds = array<i64: 128, 128>}, {pipeline_mode = #tpu.pipeline_mode<synchronous>, transform_indices = @transform_12, window_bounds = array<i64: 1, 128>}, {pipeline_mode = #tpu.pipeline_mode<synchronous>, transform_indices = @transform_13, window_bounds = array<i64: 128, 128>}, {pipeline_mode = #tpu.pipeline_mode<synchronous>, transform_indices = @transform_14, window_bounds = array<i64: 1, 128>}, {pipeline_mode = #tpu.pipeline_mode<synchronous>, transform_indices = @transform_15, window_bounds = array<i64: 128, 128>}, {pipeline_mode = #tpu.pipeline_mode<synchronous>, transform_indices = @transform_16, window_bounds = array<i64: 1, 128>}, {pipeline_mode = #tpu.pipeline_mode<synchronous>, transform_indices = @transform_17, window_bounds = array<i64: 128, 128>}, {pipeline_mode = #tpu.pipeline_mode<synchronous>, transform_indices = @transform_18, window_bounds = array<i64: 1, 128>}, {pipeline_mode = #tpu.pipeline_mode<synchronous>, transform_indices = @transform_19, window_bounds = array<i64: 8, 128>}]} {
    %c0 = arith.constant 0 : index
    %c0_0 = arith.constant 0 : index
    %0 = vector.load %arg1[%c0, %c0_0] : memref<8x128xf32, #tpu.memory_space<vmem>>, vector<8x128xf32>
    %c0_1 = arith.constant 0 : index
    %c0_2 = arith.constant 0 : index
    %1 = vector.load %arg2[%c0_1, %c0_2] : memref<128x128xf32, #tpu.memory_space<vmem>>, vector<128x128xf32>
    %cst = arith.constant dense<0.000000e+00> : vector<8x128xf32>
    %2 = tpu.matmul %0, %1, %cst {dimension_numbers = #tpu.dot_dimension_numbers<[1], [0], [0], [1], [0, 0, 1, 1], [], []>} : vector<8x128xf32>, vector<128x128xf32>, vector<8x128xf32> -> vector<8x128xf32>
    %c0_3 = arith.constant 0 : index
    %c0_4 = arith.constant 0 : index
    %3 = vector.load %arg3[%c0_3, %c0_4] : memref<1x128xf32, #tpu.memory_space<vmem>>, vector<1x128xf32>
    %4 = vector.broadcast %3 : vector<1x128xf32> to vector<8x128xf32>
    %5 = arith.addf %2, %4 : vector<8x128xf32>
    %cst_5 = arith.constant dense<0.000000e+00> : vector<128xf32>
    %6 = vector.multi_reduction <add>, %5, %cst_5 [0] : vector<8x128xf32> to vector<128xf32>
    %7 = vector.shape_cast %6 : vector<128xf32> to vector<1x128xf32>
    %cst_6 = arith.constant 8.000000e+00 : f32
    %8 = vector.broadcast %cst_6 : f32 to vector<1x128xf32>
    %9 = arith.divf %7, %8 : vector<1x128xf32>
    %10 = vector.broadcast %9 : vector<1x128xf32> to vector<8x128xf32>
    %11 = arith.subf %5, %10 : vector<8x128xf32>
    %12 = arith.mulf %11, %11 : vector<8x128xf32>
    %cst_7 = arith.constant dense<0.000000e+00> : vector<128xf32>
    %13 = vector.multi_reduction <add>, %12, %cst_7 [0] : vector<8x128xf32> to vector<128xf32>
    %14 = vector.shape_cast %13 : vector<128xf32> to vector<1x128xf32>
    %cst_8 = arith.constant 8.000000e+00 : f32
    %15 = vector.broadcast %cst_8 : f32 to vector<1x128xf32>
    %16 = arith.divf %14, %15 : vector<1x128xf32>
    %17 = vector.broadcast %9 : vector<1x128xf32> to vector<8x128xf32>
    %18 = arith.subf %5, %17 : vector<8x128xf32>
    %cst_9 = arith.constant 9.99999974E-6 : f32
    %19 = vector.broadcast %cst_9 : f32 to vector<1x128xf32>
    %20 = arith.addf %16, %19 : vector<1x128xf32>
    %21 = math.rsqrt %20 : vector<1x128xf32>
    %22 = vector.broadcast %21 : vector<1x128xf32> to vector<8x128xf32>
    %23 = arith.mulf %18, %22 : vector<8x128xf32>
    %cst_10 = arith.constant 5.000000e-01 : f32
    %24 = vector.broadcast %cst_10 : f32 to vector<8x128xf32>
    %25 = arith.mulf %24, %23 : vector<8x128xf32>
    %cst_11 = arith.constant 0.707106769 : f32
    %26 = vector.broadcast %cst_11 : f32 to vector<8x128xf32>
    %27 = arith.mulf %23, %26 : vector<8x128xf32>
    %28 = math.erf %27 : vector<8x128xf32>
    %cst_12 = arith.constant 1.000000e+00 : f32
    %29 = vector.broadcast %cst_12 : f32 to vector<8x128xf32>
    %30 = arith.addf %29, %28 : vector<8x128xf32>
    %31 = arith.mulf %25, %30 : vector<8x128xf32>
    %c0_13 = arith.constant 0 : index
    %c0_14 = arith.constant 0 : index
    %32 = vector.load %arg4[%c0_13, %c0_14] : memref<128x128xf32, #tpu.memory_space<vmem>>, vector<128x128xf32>
    %cst_15 = arith.constant dense<0.000000e+00> : vector<8x128xf32>
    %33 = tpu.matmul %31, %32, %cst_15 {dimension_numbers = #tpu.dot_dimension_numbers<[1], [0], [0], [1], [0, 0, 1, 1], [], []>} : vector<8x128xf32>, vector<128x128xf32>, vector<8x128xf32> -> vector<8x128xf32>
    %c0_16 = arith.constant 0 : index
    %c0_17 = arith.constant 0 : index
    %34 = vector.load %arg5[%c0_16, %c0_17] : memref<1x128xf32, #tpu.memory_space<vmem>>, vector<1x128xf32>
    %35 = vector.broadcast %34 : vector<1x128xf32> to vector<8x128xf32>
    %36 = arith.addf %33, %35 : vector<8x128xf32>
    %cst_18 = arith.constant dense<0.000000e+00> : vector<128xf32>
    %37 = vector.multi_reduction <add>, %36, %cst_18 [0] : vector<8x128xf32> to vector<128xf32>
    %38 = vector.shape_cast %37 : vector<128xf32> to vector<1x128xf32>
    %cst_19 = arith.constant 8.000000e+00 : f32
    %39 = vector.broadcast %cst_19 : f32 to vector<1x128xf32>
    %40 = arith.divf %38, %39 : vector<1x128xf32>
    %41 = vector.broadcast %40 : vector<1x128xf32> to vector<8x128xf32>
    %42 = arith.subf %36, %41 : vector<8x128xf32>
    %43 = arith.mulf %42, %42 : vector<8x128xf32>
    %cst_20 = arith.constant dense<0.000000e+00> : vector<128xf32>
    %44 = vector.multi_reduction <add>, %43, %cst_20 [0] : vector<8x128xf32> to vector<128xf32>
    %45 = vector.shape_cast %44 : vector<128xf32> to vector<1x128xf32>
    %cst_21 = arith.constant 8.000000e+00 : f32
    %46 = vector.broadcast %cst_21 : f32 to vector<1x128xf32>
    %47 = arith.divf %45, %46 : vector<1x128xf32>
    %48 = vector.broadcast %40 : vector<1x128xf32> to vector<8x128xf32>
    %49 = arith.subf %36, %48 : vector<8x128xf32>
    %cst_22 = arith.constant 9.99999974E-6 : f32
    %50 = vector.broadcast %cst_22 : f32 to vector<1x128xf32>
    %51 = arith.addf %47, %50 : vector<1x128xf32>
    %52 = math.rsqrt %51 : vector<1x128xf32>
    %53 = vector.broadcast %52 : vector<1x128xf32> to vector<8x128xf32>
    %54 = arith.mulf %49, %53 : vector<8x128xf32>
    %cst_23 = arith.constant 5.000000e-01 : f32
    %55 = vector.broadcast %cst_23 : f32 to vector<8x128xf32>
    %56 = arith.mulf %55, %54 : vector<8x128xf32>
    %cst_24 = arith.constant 0.707106769 : f32
    %57 = vector.broadcast %cst_24 : f32 to vector<8x128xf32>
    %58 = arith.mulf %54, %57 : vector<8x128xf32>
    %59 = math.erf %58 : vector<8x128xf32>
    %cst_25 = arith.constant 1.000000e+00 : f32
    %60 = vector.broadcast %cst_25 : f32 to vector<8x128xf32>
    %61 = arith.addf %60, %59 : vector<8x128xf32>
    %62 = arith.mulf %56, %61 : vector<8x128xf32>
    %c0_26 = arith.constant 0 : index
    %c0_27 = arith.constant 0 : index
    %63 = vector.load %arg6[%c0_26, %c0_27] : memref<128x128xf32, #tpu.memory_space<vmem>>, vector<128x128xf32>
    %cst_28 = arith.constant dense<0.000000e+00> : vector<8x128xf32>
    %64 = tpu.matmul %62, %63, %cst_28 {dimension_numbers = #tpu.dot_dimension_numbers<[1], [0], [0], [1], [0, 0, 1, 1], [], []>} : vector<8x128xf32>, vector<128x128xf32>, vector<8x128xf32> -> vector<8x128xf32>
    %c0_29 = arith.constant 0 : index
    %c0_30 = arith.constant 0 : index
    %65 = vector.load %arg7[%c0_29, %c0_30] : memref<1x128xf32, #tpu.memory_space<vmem>>, vector<1x128xf32>
    %66 = vector.broadcast %65 : vector<1x128xf32> to vector<8x128xf32>
    %67 = arith.addf %64, %66 : vector<8x128xf32>
    %cst_31 = arith.constant dense<0.000000e+00> : vector<128xf32>
    %68 = vector.multi_reduction <add>, %67, %cst_31 [0] : vector<8x128xf32> to vector<128xf32>
    %69 = vector.shape_cast %68 : vector<128xf32> to vector<1x128xf32>
    %cst_32 = arith.constant 8.000000e+00 : f32
    %70 = vector.broadcast %cst_32 : f32 to vector<1x128xf32>
    %71 = arith.divf %69, %70 : vector<1x128xf32>
    %72 = vector.broadcast %71 : vector<1x128xf32> to vector<8x128xf32>
    %73 = arith.subf %67, %72 : vector<8x128xf32>
    %74 = arith.mulf %73, %73 : vector<8x128xf32>
    %cst_33 = arith.constant dense<0.000000e+00> : vector<128xf32>
    %75 = vector.multi_reduction <add>, %74, %cst_33 [0] : vector<8x128xf32> to vector<128xf32>
    %76 = vector.shape_cast %75 : vector<128xf32> to vector<1x128xf32>
    %cst_34 = arith.constant 8.000000e+00 : f32
    %77 = vector.broadcast %cst_34 : f32 to vector<1x128xf32>
    %78 = arith.divf %76, %77 : vector<1x128xf32>
    %79 = vector.broadcast %71 : vector<1x128xf32> to vector<8x128xf32>
    %80 = arith.subf %67, %79 : vector<8x128xf32>
    %cst_35 = arith.constant 9.99999974E-6 : f32
    %81 = vector.broadcast %cst_35 : f32 to vector<1x128xf32>
    %82 = arith.addf %78, %81 : vector<1x128xf32>
    %83 = math.rsqrt %82 : vector<1x128xf32>
    %84 = vector.broadcast %83 : vector<1x128xf32> to vector<8x128xf32>
    %85 = arith.mulf %80, %84 : vector<8x128xf32>
    %86 = arith.addf %31, %85 : vector<8x128xf32>
    %cst_36 = arith.constant 5.000000e-01 : f32
    %87 = vector.broadcast %cst_36 : f32 to vector<8x128xf32>
    %88 = arith.mulf %87, %86 : vector<8x128xf32>
    %cst_37 = arith.constant 0.707106769 : f32
    %89 = vector.broadcast %cst_37 : f32 to vector<8x128xf32>
    %90 = arith.mulf %86, %89 : vector<8x128xf32>
    %91 = math.erf %90 : vector<8x128xf32>
    %cst_38 = arith.constant 1.000000e+00 : f32
    %92 = vector.broadcast %cst_38 : f32 to vector<8x128xf32>
    %93 = arith.addf %92, %91 : vector<8x128xf32>
    %94 = arith.mulf %88, %93 : vector<8x128xf32>
    %c0_39 = arith.constant 0 : index
    %c0_40 = arith.constant 0 : index
    %95 = vector.load %arg8[%c0_39, %c0_40] : memref<128x128xf32, #tpu.memory_space<vmem>>, vector<128x128xf32>
    %cst_41 = arith.constant dense<0.000000e+00> : vector<8x128xf32>
    %96 = tpu.matmul %94, %95, %cst_41 {dimension_numbers = #tpu.dot_dimension_numbers<[1], [0], [0], [1], [0, 0, 1, 1], [], []>} : vector<8x128xf32>, vector<128x128xf32>, vector<8x128xf32> -> vector<8x128xf32>
    %c0_42 = arith.constant 0 : index
    %c0_43 = arith.constant 0 : index
    %97 = vector.load %arg9[%c0_42, %c0_43] : memref<1x128xf32, #tpu.memory_space<vmem>>, vector<1x128xf32>
    %98 = vector.broadcast %97 : vector<1x128xf32> to vector<8x128xf32>
    %99 = arith.addf %96, %98 : vector<8x128xf32>
    %cst_44 = arith.constant dense<0.000000e+00> : vector<128xf32>
    %100 = vector.multi_reduction <add>, %99, %cst_44 [0] : vector<8x128xf32> to vector<128xf32>
    %101 = vector.shape_cast %100 : vector<128xf32> to vector<1x128xf32>
    %cst_45 = arith.constant 8.000000e+00 : f32
    %102 = vector.broadcast %cst_45 : f32 to vector<1x128xf32>
    %103 = arith.divf %101, %102 : vector<1x128xf32>
    %104 = vector.broadcast %103 : vector<1x128xf32> to vector<8x128xf32>
    %105 = arith.subf %99, %104 : vector<8x128xf32>
    %106 = arith.mulf %105, %105 : vector<8x128xf32>
    %cst_46 = arith.constant dense<0.000000e+00> : vector<128xf32>
    %107 = vector.multi_reduction <add>, %106, %cst_46 [0] : vector<8x128xf32> to vector<128xf32>
    %108 = vector.shape_cast %107 : vector<128xf32> to vector<1x128xf32>
    %cst_47 = arith.constant 8.000000e+00 : f32
    %109 = vector.broadcast %cst_47 : f32 to vector<1x128xf32>
    %110 = arith.divf %108, %109 : vector<1x128xf32>
    %111 = vector.broadcast %103 : vector<1x128xf32> to vector<8x128xf32>
    %112 = arith.subf %99, %111 : vector<8x128xf32>
    %cst_48 = arith.constant 9.99999974E-6 : f32
    %113 = vector.broadcast %cst_48 : f32 to vector<1x128xf32>
    %114 = arith.addf %110, %113 : vector<1x128xf32>
    %115 = math.rsqrt %114 : vector<1x128xf32>
    %116 = vector.broadcast %115 : vector<1x128xf32> to vector<8x128xf32>
    %117 = arith.mulf %112, %116 : vector<8x128xf32>
    %cst_49 = arith.constant 5.000000e-01 : f32
    %118 = vector.broadcast %cst_49 : f32 to vector<8x128xf32>
    %119 = arith.mulf %118, %117 : vector<8x128xf32>
    %cst_50 = arith.constant 0.707106769 : f32
    %120 = vector.broadcast %cst_50 : f32 to vector<8x128xf32>
    %121 = arith.mulf %117, %120 : vector<8x128xf32>
    %122 = math.erf %121 : vector<8x128xf32>
    %cst_51 = arith.constant 1.000000e+00 : f32
    %123 = vector.broadcast %cst_51 : f32 to vector<8x128xf32>
    %124 = arith.addf %123, %122 : vector<8x128xf32>
    %125 = arith.mulf %119, %124 : vector<8x128xf32>
    %c0_52 = arith.constant 0 : index
    %c0_53 = arith.constant 0 : index
    %126 = vector.load %arg10[%c0_52, %c0_53] : memref<128x128xf32, #tpu.memory_space<vmem>>, vector<128x128xf32>
    %cst_54 = arith.constant dense<0.000000e+00> : vector<8x128xf32>
    %127 = tpu.matmul %125, %126, %cst_54 {dimension_numbers = #tpu.dot_dimension_numbers<[1], [0], [0], [1], [0, 0, 1, 1], [], []>} : vector<8x128xf32>, vector<128x128xf32>, vector<8x128xf32> -> vector<8x128xf32>
    %c0_55 = arith.constant 0 : index
    %c0_56 = arith.constant 0 : index
    %128 = vector.load %arg11[%c0_55, %c0_56] : memref<1x128xf32, #tpu.memory_space<vmem>>, vector<1x128xf32>
    %129 = vector.broadcast %128 : vector<1x128xf32> to vector<8x128xf32>
    %130 = arith.addf %127, %129 : vector<8x128xf32>
    %cst_57 = arith.constant dense<0.000000e+00> : vector<128xf32>
    %131 = vector.multi_reduction <add>, %130, %cst_57 [0] : vector<8x128xf32> to vector<128xf32>
    %132 = vector.shape_cast %131 : vector<128xf32> to vector<1x128xf32>
    %cst_58 = arith.constant 8.000000e+00 : f32
    %133 = vector.broadcast %cst_58 : f32 to vector<1x128xf32>
    %134 = arith.divf %132, %133 : vector<1x128xf32>
    %135 = vector.broadcast %134 : vector<1x128xf32> to vector<8x128xf32>
    %136 = arith.subf %130, %135 : vector<8x128xf32>
    %137 = arith.mulf %136, %136 : vector<8x128xf32>
    %cst_59 = arith.constant dense<0.000000e+00> : vector<128xf32>
    %138 = vector.multi_reduction <add>, %137, %cst_59 [0] : vector<8x128xf32> to vector<128xf32>
    %139 = vector.shape_cast %138 : vector<128xf32> to vector<1x128xf32>
    %cst_60 = arith.constant 8.000000e+00 : f32
    %140 = vector.broadcast %cst_60 : f32 to vector<1x128xf32>
    %141 = arith.divf %139, %140 : vector<1x128xf32>
    %142 = vector.broadcast %134 : vector<1x128xf32> to vector<8x128xf32>
    %143 = arith.subf %130, %142 : vector<8x128xf32>
    %cst_61 = arith.constant 9.99999974E-6 : f32
    %144 = vector.broadcast %cst_61 : f32 to vector<1x128xf32>
    %145 = arith.addf %141, %144 : vector<1x128xf32>
    %146 = math.rsqrt %145 : vector<1x128xf32>
    %147 = vector.broadcast %146 : vector<1x128xf32> to vector<8x128xf32>
    %148 = arith.mulf %143, %147 : vector<8x128xf32>
    %149 = arith.addf %94, %148 : vector<8x128xf32>
    %cst_62 = arith.constant 5.000000e-01 : f32
    %150 = vector.broadcast %cst_62 : f32 to vector<8x128xf32>
    %151 = arith.mulf %150, %149 : vector<8x128xf32>
    %cst_63 = arith.constant 0.707106769 : f32
    %152 = vector.broadcast %cst_63 : f32 to vector<8x128xf32>
    %153 = arith.mulf %149, %152 : vector<8x128xf32>
    %154 = math.erf %153 : vector<8x128xf32>
    %cst_64 = arith.constant 1.000000e+00 : f32
    %155 = vector.broadcast %cst_64 : f32 to vector<8x128xf32>
    %156 = arith.addf %155, %154 : vector<8x128xf32>
    %157 = arith.mulf %151, %156 : vector<8x128xf32>
    %c0_65 = arith.constant 0 : index
    %c0_66 = arith.constant 0 : index
    %158 = vector.load %arg12[%c0_65, %c0_66] : memref<128x128xf32, #tpu.memory_space<vmem>>, vector<128x128xf32>
    %cst_67 = arith.constant dense<0.000000e+00> : vector<8x128xf32>
    %159 = tpu.matmul %157, %158, %cst_67 {dimension_numbers = #tpu.dot_dimension_numbers<[1], [0], [0], [1], [0, 0, 1, 1], [], []>} : vector<8x128xf32>, vector<128x128xf32>, vector<8x128xf32> -> vector<8x128xf32>
    %c0_68 = arith.constant 0 : index
    %c0_69 = arith.constant 0 : index
    %160 = vector.load %arg13[%c0_68, %c0_69] : memref<1x128xf32, #tpu.memory_space<vmem>>, vector<1x128xf32>
    %161 = vector.broadcast %160 : vector<1x128xf32> to vector<8x128xf32>
    %162 = arith.addf %159, %161 : vector<8x128xf32>
    %cst_70 = arith.constant dense<0.000000e+00> : vector<128xf32>
    %163 = vector.multi_reduction <add>, %162, %cst_70 [0] : vector<8x128xf32> to vector<128xf32>
    %164 = vector.shape_cast %163 : vector<128xf32> to vector<1x128xf32>
    %cst_71 = arith.constant 8.000000e+00 : f32
    %165 = vector.broadcast %cst_71 : f32 to vector<1x128xf32>
    %166 = arith.divf %164, %165 : vector<1x128xf32>
    %167 = vector.broadcast %166 : vector<1x128xf32> to vector<8x128xf32>
    %168 = arith.subf %162, %167 : vector<8x128xf32>
    %169 = arith.mulf %168, %168 : vector<8x128xf32>
    %cst_72 = arith.constant dense<0.000000e+00> : vector<128xf32>
    %170 = vector.multi_reduction <add>, %169, %cst_72 [0] : vector<8x128xf32> to vector<128xf32>
    %171 = vector.shape_cast %170 : vector<128xf32> to vector<1x128xf32>
    %cst_73 = arith.constant 8.000000e+00 : f32
    %172 = vector.broadcast %cst_73 : f32 to vector<1x128xf32>
    %173 = arith.divf %171, %172 : vector<1x128xf32>
    %174 = vector.broadcast %166 : vector<1x128xf32> to vector<8x128xf32>
    %175 = arith.subf %162, %174 : vector<8x128xf32>
    %cst_74 = arith.constant 9.99999974E-6 : f32
    %176 = vector.broadcast %cst_74 : f32 to vector<1x128xf32>
    %177 = arith.addf %173, %176 : vector<1x128xf32>
    %178 = math.rsqrt %177 : vector<1x128xf32>
    %179 = vector.broadcast %178 : vector<1x128xf32> to vector<8x128xf32>
    %180 = arith.mulf %175, %179 : vector<8x128xf32>
    %cst_75 = arith.constant 5.000000e-01 : f32
    %181 = vector.broadcast %cst_75 : f32 to vector<8x128xf32>
    %182 = arith.mulf %181, %180 : vector<8x128xf32>
    %cst_76 = arith.constant 0.707106769 : f32
    %183 = vector.broadcast %cst_76 : f32 to vector<8x128xf32>
    %184 = arith.mulf %180, %183 : vector<8x128xf32>
    %185 = math.erf %184 : vector<8x128xf32>
    %cst_77 = arith.constant 1.000000e+00 : f32
    %186 = vector.broadcast %cst_77 : f32 to vector<8x128xf32>
    %187 = arith.addf %186, %185 : vector<8x128xf32>
    %188 = arith.mulf %182, %187 : vector<8x128xf32>
    %c0_78 = arith.constant 0 : index
    %c0_79 = arith.constant 0 : index
    %189 = vector.load %arg14[%c0_78, %c0_79] : memref<128x128xf32, #tpu.memory_space<vmem>>, vector<128x128xf32>
    %cst_80 = arith.constant dense<0.000000e+00> : vector<8x128xf32>
    %190 = tpu.matmul %188, %189, %cst_80 {dimension_numbers = #tpu.dot_dimension_numbers<[1], [0], [0], [1], [0, 0, 1, 1], [], []>} : vector<8x128xf32>, vector<128x128xf32>, vector<8x128xf32> -> vector<8x128xf32>
    %c0_81 = arith.constant 0 : index
    %c0_82 = arith.constant 0 : index
    %191 = vector.load %arg15[%c0_81, %c0_82] : memref<1x128xf32, #tpu.memory_space<vmem>>, vector<1x128xf32>
    %192 = vector.broadcast %191 : vector<1x128xf32> to vector<8x128xf32>
    %193 = arith.addf %190, %192 : vector<8x128xf32>
    %cst_83 = arith.constant dense<0.000000e+00> : vector<128xf32>
    %194 = vector.multi_reduction <add>, %193, %cst_83 [0] : vector<8x128xf32> to vector<128xf32>
    %195 = vector.shape_cast %194 : vector<128xf32> to vector<1x128xf32>
    %cst_84 = arith.constant 8.000000e+00 : f32
    %196 = vector.broadcast %cst_84 : f32 to vector<1x128xf32>
    %197 = arith.divf %195, %196 : vector<1x128xf32>
    %198 = vector.broadcast %197 : vector<1x128xf32> to vector<8x128xf32>
    %199 = arith.subf %193, %198 : vector<8x128xf32>
    %200 = arith.mulf %199, %199 : vector<8x128xf32>
    %cst_85 = arith.constant dense<0.000000e+00> : vector<128xf32>
    %201 = vector.multi_reduction <add>, %200, %cst_85 [0] : vector<8x128xf32> to vector<128xf32>
    %202 = vector.shape_cast %201 : vector<128xf32> to vector<1x128xf32>
    %cst_86 = arith.constant 8.000000e+00 : f32
    %203 = vector.broadcast %cst_86 : f32 to vector<1x128xf32>
    %204 = arith.divf %202, %203 : vector<1x128xf32>
    %205 = vector.broadcast %197 : vector<1x128xf32> to vector<8x128xf32>
    %206 = arith.subf %193, %205 : vector<8x128xf32>
    %cst_87 = arith.constant 9.99999974E-6 : f32
    %207 = vector.broadcast %cst_87 : f32 to vector<1x128xf32>
    %208 = arith.addf %204, %207 : vector<1x128xf32>
    %209 = math.rsqrt %208 : vector<1x128xf32>
    %210 = vector.broadcast %209 : vector<1x128xf32> to vector<8x128xf32>
    %211 = arith.mulf %206, %210 : vector<8x128xf32>
    %212 = arith.addf %157, %211 : vector<8x128xf32>
    %cst_88 = arith.constant 5.000000e-01 : f32
    %213 = vector.broadcast %cst_88 : f32 to vector<8x128xf32>
    %214 = arith.mulf %213, %212 : vector<8x128xf32>
    %cst_89 = arith.constant 0.707106769 : f32
    %215 = vector.broadcast %cst_89 : f32 to vector<8x128xf32>
    %216 = arith.mulf %212, %215 : vector<8x128xf32>
    %217 = math.erf %216 : vector<8x128xf32>
    %cst_90 = arith.constant 1.000000e+00 : f32
    %218 = vector.broadcast %cst_90 : f32 to vector<8x128xf32>
    %219 = arith.addf %218, %217 : vector<8x128xf32>
    %220 = arith.mulf %214, %219 : vector<8x128xf32>
    %c0_91 = arith.constant 0 : index
    %c0_92 = arith.constant 0 : index
    %221 = vector.load %arg16[%c0_91, %c0_92] : memref<128x128xf32, #tpu.memory_space<vmem>>, vector<128x128xf32>
    %cst_93 = arith.constant dense<0.000000e+00> : vector<8x128xf32>
    %222 = tpu.matmul %220, %221, %cst_93 {dimension_numbers = #tpu.dot_dimension_numbers<[1], [0], [0], [1], [0, 0, 1, 1], [], []>} : vector<8x128xf32>, vector<128x128xf32>, vector<8x128xf32> -> vector<8x128xf32>
    %c0_94 = arith.constant 0 : index
    %c0_95 = arith.constant 0 : index
    %223 = vector.load %arg17[%c0_94, %c0_95] : memref<1x128xf32, #tpu.memory_space<vmem>>, vector<1x128xf32>
    %224 = vector.broadcast %223 : vector<1x128xf32> to vector<8x128xf32>
    %225 = arith.addf %222, %224 : vector<8x128xf32>
    %cst_96 = arith.constant dense<0.000000e+00> : vector<128xf32>
    %226 = vector.multi_reduction <add>, %225, %cst_96 [0] : vector<8x128xf32> to vector<128xf32>
    %227 = vector.shape_cast %226 : vector<128xf32> to vector<1x128xf32>
    %cst_97 = arith.constant 8.000000e+00 : f32
    %228 = vector.broadcast %cst_97 : f32 to vector<1x128xf32>
    %229 = arith.divf %227, %228 : vector<1x128xf32>
    %230 = vector.broadcast %229 : vector<1x128xf32> to vector<8x128xf32>
    %231 = arith.subf %225, %230 : vector<8x128xf32>
    %232 = arith.mulf %231, %231 : vector<8x128xf32>
    %cst_98 = arith.constant dense<0.000000e+00> : vector<128xf32>
    %233 = vector.multi_reduction <add>, %232, %cst_98 [0] : vector<8x128xf32> to vector<128xf32>
    %234 = vector.shape_cast %233 : vector<128xf32> to vector<1x128xf32>
    %cst_99 = arith.constant 8.000000e+00 : f32
    %235 = vector.broadcast %cst_99 : f32 to vector<1x128xf32>
    %236 = arith.divf %234, %235 : vector<1x128xf32>
    %237 = vector.broadcast %229 : vector<1x128xf32> to vector<8x128xf32>
    %238 = arith.subf %225, %237 : vector<8x128xf32>
    %cst_100 = arith.constant 9.99999974E-6 : f32
    %239 = vector.broadcast %cst_100 : f32 to vector<1x128xf32>
    %240 = arith.addf %236, %239 : vector<1x128xf32>
    %241 = math.rsqrt %240 : vector<1x128xf32>
    %242 = vector.broadcast %241 : vector<1x128xf32> to vector<8x128xf32>
    %243 = arith.mulf %238, %242 : vector<8x128xf32>
    %cst_101 = arith.constant 5.000000e-01 : f32
    %244 = vector.broadcast %cst_101 : f32 to vector<8x128xf32>
    %245 = arith.mulf %244, %243 : vector<8x128xf32>
    %cst_102 = arith.constant 0.707106769 : f32
    %246 = vector.broadcast %cst_102 : f32 to vector<8x128xf32>
    %247 = arith.mulf %243, %246 : vector<8x128xf32>
    %248 = math.erf %247 : vector<8x128xf32>
    %cst_103 = arith.constant 1.000000e+00 : f32
    %249 = vector.broadcast %cst_103 : f32 to vector<8x128xf32>
    %250 = arith.addf %249, %248 : vector<8x128xf32>
    %251 = arith.mulf %245, %250 : vector<8x128xf32>
    %c0_104 = arith.constant 0 : index
    %c0_105 = arith.constant 0 : index
    %252 = vector.load %arg18[%c0_104, %c0_105] : memref<128x128xf32, #tpu.memory_space<vmem>>, vector<128x128xf32>
    %cst_106 = arith.constant dense<0.000000e+00> : vector<8x128xf32>
    %253 = tpu.matmul %251, %252, %cst_106 {dimension_numbers = #tpu.dot_dimension_numbers<[1], [0], [0], [1], [0, 0, 1, 1], [], []>} : vector<8x128xf32>, vector<128x128xf32>, vector<8x128xf32> -> vector<8x128xf32>
    %c0_107 = arith.constant 0 : index
    %c0_108 = arith.constant 0 : index
    %254 = vector.load %arg19[%c0_107, %c0_108] : memref<1x128xf32, #tpu.memory_space<vmem>>, vector<1x128xf32>
    %255 = vector.broadcast %254 : vector<1x128xf32> to vector<8x128xf32>
    %256 = arith.addf %253, %255 : vector<8x128xf32>
    %c0_109 = arith.constant 0 : index
    %c0_110 = arith.constant 0 : index
    %257 = vector.load %arg20[%c0_109, %c0_110] : memref<8x128xf32, #tpu.memory_space<vmem>>, vector<8x128xf32>
    tpu.vector_store %arg20[%c0_109, %c0_110], %256 {strides = array<i32>} : memref<8x128xf32, #tpu.memory_space<vmem>>, vector<8x128xf32>,
    return
  }
  func.func @transform_0(%arg0: i32) -> (i32, i32) {
    %c0_i32 = arith.constant 0 : i32
    %c0_i32_0 = arith.constant 0 : i32
    %c0_i32_1 = arith.constant 0 : i32
    return %c0_i32, %c0_i32_0 : i32, i32
  }
  func.func @transform_1(%arg0: i32) -> (i32, i32) {
    %c0_i32 = arith.constant 0 : i32
    %c0_i32_0 = arith.constant 0 : i32
    %c0_i32_1 = arith.constant 0 : i32
    return %c0_i32, %c0_i32_0 : i32, i32
  }
  func.func @transform_2(%arg0: i32) -> (i32, i32) {
    %c0_i32 = arith.constant 0 : i32
    %c0_i32_0 = arith.constant 0 : i32
    %c0_i32_1 = arith.constant 0 : i32
    return %c0_i32, %c0_i32_0 : i32, i32
  }
  func.func @transform_3(%arg0: i32) -> (i32, i32) {
    %c0_i32 = arith.constant 0 : i32
    %c0_i32_0 = arith.constant 0 : i32
    %c0_i32_1 = arith.constant 0 : i32
    return %c0_i32, %c0_i32_0 : i32, i32
  }
  func.func @transform_4(%arg0: i32) -> (i32, i32) {
    %c0_i32 = arith.constant 0 : i32
    %c0_i32_0 = arith.constant 0 : i32
    %c0_i32_1 = arith.constant 0 : i32
    return %c0_i32, %c0_i32_0 : i32, i32
  }
  func.func @transform_5(%arg0: i32) -> (i32, i32) {
    %c0_i32 = arith.constant 0 : i32
    %c0_i32_0 = arith.constant 0 : i32
    %c0_i32_1 = arith.constant 0 : i32
    return %c0_i32, %c0_i32_0 : i32, i32
  }
  func.func @transform_6(%arg0: i32) -> (i32, i32) {
    %c0_i32 = arith.constant 0 : i32
    %c0_i32_0 = arith.constant 0 : i32
    %c0_i32_1 = arith.constant 0 : i32
    return %c0_i32, %c0_i32_0 : i32, i32
  }
  func.func @transform_7(%arg0: i32) -> (i32, i32) {
    %c0_i32 = arith.constant 0 : i32
    %c0_i32_0 = arith.constant 0 : i32
    %c0_i32_1 = arith.constant 0 : i32
    return %c0_i32, %c0_i32_0 : i32, i32
  }
  func.func @transform_8(%arg0: i32) -> (i32, i32) {
    %c0_i32 = arith.constant 0 : i32
    %c0_i32_0 = arith.constant 0 : i32
    %c0_i32_1 = arith.constant 0 : i32
    return %c0_i32, %c0_i32_0 : i32, i32
  }
  func.func @transform_9(%arg0: i32) -> (i32, i32) {
    %c0_i32 = arith.constant 0 : i32
    %c0_i32_0 = arith.constant 0 : i32
    %c0_i32_1 = arith.constant 0 : i32
    return %c0_i32, %c0_i32_0 : i32, i32
  }
  func.func @transform_10(%arg0: i32) -> (i32, i32) {
    %c0_i32 = arith.constant 0 : i32
    %c0_i32_0 = arith.constant 0 : i32
    %c0_i32_1 = arith.constant 0 : i32
    return %c0_i32, %c0_i32_0 : i32, i32
  }
  func.func @transform_11(%arg0: i32) -> (i32, i32) {
    %c0_i32 = arith.constant 0 : i32
    %c0_i32_0 = arith.constant 0 : i32
    %c0_i32_1 = arith.constant 0 : i32
    return %c0_i32, %c0_i32_0 : i32, i32
  }
  func.func @transform_12(%arg0: i32) -> (i32, i32) {
    %c0_i32 = arith.constant 0 : i32
    %c0_i32_0 = arith.constant 0 : i32
    %c0_i32_1 = arith.constant 0 : i32
    return %c0_i32, %c0_i32_0 : i32, i32
  }
  func.func @transform_13(%arg0: i32) -> (i32, i32) {
    %c0_i32 = arith.constant 0 : i32
    %c0_i32_0 = arith.constant 0 : i32
    %c0_i32_1 = arith.constant 0 : i32
    return %c0_i32, %c0_i32_0 : i32, i32
  }
  func.func @transform_14(%arg0: i32) -> (i32, i32) {
    %c0_i32 = arith.constant 0 : i32
    %c0_i32_0 = arith.constant 0 : i32
    %c0_i32_1 = arith.constant 0 : i32
    return %c0_i32, %c0_i32_0 : i32, i32
  }
  func.func @transform_15(%arg0: i32) -> (i32, i32) {
    %c0_i32 = arith.constant 0 : i32
    %c0_i32_0 = arith.constant 0 : i32
    %c0_i32_1 = arith.constant 0 : i32
    return %c0_i32, %c0_i32_0 : i32, i32
  }
  func.func @transform_16(%arg0: i32) -> (i32, i32) {
    %c0_i32 = arith.constant 0 : i32
    %c0_i32_0 = arith.constant 0 : i32
    %c0_i32_1 = arith.constant 0 : i32
    return %c0_i32, %c0_i32_0 : i32, i32
  }
  func.func @transform_17(%arg0: i32) -> (i32, i32) {
    %c0_i32 = arith.constant 0 : i32
    %c0_i32_0 = arith.constant 0 : i32
    %c0_i32_1 = arith.constant 0 : i32
    return %c0_i32, %c0_i32_0 : i32, i32
  }
  func.func @transform_18(%arg0: i32) -> (i32, i32) {
    %c0_i32 = arith.constant 0 : i32
    %c0_i32_0 = arith.constant 0 : i32
    %c0_i32_1 = arith.constant 0 : i32
    return %c0_i32, %c0_i32_0 : i32, i32
  }
  func.func @transform_19(%arg0: i32) -> (i32, i32) {
    %c0_i32 = arith.constant 0 : i32
    %c0_i32_0 = arith.constant 0 : i32
    %c0_i32_1 = arith.constant 0 : i32
    return %c0_i32, %c0_i32_0 : i32, i32
  }
}

</mosaic_0001>

<llo_original>
// kernel: improved_dnn_forward.1
$region0: #{improved_dnn_forward.1}
  #allocation0 [shape = 'u32[]', space=smem, size = 0x4, offset = 0x4, fixed_abs, tag = 'smem constant byte address 0x4 - core index']
  #allocation1 [shape = 'u32[144,128]{1,0:T(1,128)}', space=vmem, size = 0x12000, scoped, tag = 'internal scratch']
  %s0 = inlined_call_operand.hbm [shape: f32[8,128], index: 0, kind: input, shape index: {}]
  %s1 = inlined_call_operand.hbm [shape: f32[128,128], index: 1, kind: input, shape index: {}]
  %s2 = inlined_call_operand.hbm [shape: f32[1,128], index: 2, kind: input, shape index: {}]
  %s3 = inlined_call_operand.hbm [shape: f32[128,128], index: 3, kind: input, shape index: {}]
  %s4 = inlined_call_operand.hbm [shape: f32[1,128], index: 4, kind: input, shape index: {}]
  %s5 = inlined_call_operand.hbm [shape: f32[128,128], index: 5, kind: input, shape index: {}]
  %s6 = inlined_call_operand.hbm [shape: f32[1,128], index: 6, kind: input, shape index: {}]
  %s7 = inlined_call_operand.hbm [shape: f32[128,128], index: 7, kind: input, shape index: {}]
  %s8 = inlined_call_operand.hbm [shape: f32[1,128], index: 8, kind: input, shape index: {}]
  %s9 = inlined_call_operand.hbm [shape: f32[128,128], index: 9, kind: input, shape index: {}]
  %s10 = inlined_call_operand.hbm [shape: f32[1,128], index: 10, kind: input, shape index: {}]
  %s11 = inlined_call_operand.hbm [shape: f32[128,128], index: 11, kind: input, shape index: {}]
  %s12 = inlined_call_operand.hbm [shape: f32[1,128], index: 12, kind: input, shape index: {}]
  %s13 = inlined_call_operand.hbm [shape: f32[128,128], index: 13, kind: input, shape index: {}]
  %s14 = inlined_call_operand.hbm [shape: f32[1,128], index: 14, kind: input, shape index: {}]
  %s15 = inlined_call_operand.hbm [shape: f32[128,128], index: 15, kind: input, shape index: {}]
  %s16 = inlined_call_operand.hbm [shape: f32[1,128], index: 16, kind: input, shape index: {}]
  %s17 = inlined_call_operand.hbm [shape: f32[128,128], index: 17, kind: input, shape index: {}]
  %s18 = inlined_call_operand.hbm [shape: f32[1,128], index: 18, kind: input, shape index: {}]
  %s19 = inlined_call_operand.hbm [shape: f32[8,128], index: 19, kind: output, shape index: {}]
  %s20 = sld [smem:[#allocation0]]
  $region162: #{improved_dnn_forward.1} parent=0
    _
  %s22 = ssub.s32 1, %s20
  %s23 = scalar_select 0, %s22, %s20
  $region1: #{improved_dnn_forward.1} parent=0
    #allocation2 [shape = 'u8[4096]{0}', space=vmem, size = 0x1000, scoped, tag = 'input window, operand 0, single buffered']
    #allocation3 [shape = 's32[1]{0}', space=sflag, size = 0x4, scoped, tag = 'scoped memory for improved_dnn_forward.1']
    #allocation4 [shape = 's32[1]{0}', space=sflag, size = 0x4, scoped, tag = 'scoped memory for improved_dnn_forward.1']
    #allocation5 [shape = 'u8[65536]{0}', space=vmem, size = 0x10000, scoped, tag = 'input window, operand 1, single buffered']
    #allocation6 [shape = 's32[1]{0}', space=sflag, size = 0x4, scoped, tag = 'scoped memory for improved_dnn_forward.1']
    #allocation7 [shape = 'u8[512]{0}', space=vmem, size = 0x400, scoped, tag = 'input window, operand 2, single buffered']
    #allocation8 [shape = 'u8[65536]{0}', space=vmem, size = 0x10000, scoped, tag = 'input window, operand 3, single buffered']
    #allocation9 [shape = 's32[1]{0}', space=sflag, size = 0x4, scoped, tag = 'scoped memory for improved_dnn_forward.1']
    #allocation10 [shape = 'u8[512]{0}', space=vmem, size = 0x400, scoped, tag = 'input window, operand 4, single buffered']
    #allocation11 [shape = 'u8[65536]{0}', space=vmem, size = 0x10000, scoped, tag = 'input window, operand 5, single buffered']
    #allocation12 [shape = 's32[1]{0}', space=sflag, size = 0x4, scoped, tag = 'scoped memory for improved_dnn_forward.1']
    #allocation13 [shape = 'u8[512]{0}', space=vmem, size = 0x400, scoped, tag = 'input window, operand 6, single buffered']
    #allocation14 [shape = 'u8[65536]{0}', space=vmem, size = 0x10000, scoped, tag = 'input window, operand 7, single buffered']
    #allocation15 [shape = 's32[1]{0}', space=sflag, size = 0x4, scoped, tag = 'scoped memory for improved_dnn_forward.1']
    #allocation16 [shape = 'u8[512]{0}', space=vmem, size = 0x400, scoped, tag = 'input window, operand 8, single buffered']
    #allocation17 [shape = 'u8[65536]{0}', space=vmem, size = 0x10000, scoped, tag = 'input window, operand 9, single buffered']
    #allocation18 [shape = 's32[1]{0}', space=sflag, size = 0x4, scoped, tag = 'scoped memory for improved_dnn_forward.1']
    #allocation19 [shape = 'u8[512]{0}', space=vmem, size = 0x400, scoped, tag = 'input window, operand 10, single buffered']
    #allocation20 [shape = 'u8[65536]{0}', space=vmem, size = 0x10000, scoped, tag = 'input window, operand 11, single buffered']
    #allocation21 [shape = 's32[1]{0}', space=sflag, size = 0x4, scoped, tag = 'scoped memory for improved_dnn_forward.1']
    #allocation22 [shape = 'u8[512]{0}', space=vmem, size = 0x400, scoped, tag = 'input window, operand 12, single buffered']
    #allocation23 [shape = 'u8[65536]{0}', space=vmem, size = 0x10000, scoped, tag = 'input window, operand 13, single buffered']
    #allocation24 [shape = 's32[1]{0}', space=sflag, size = 0x4, scoped, tag = 'scoped memory for improved_dnn_forward.1']
    #allocation25 [shape = 'u8[512]{0}', space=vmem, size = 0x400, scoped, tag = 'input window, operand 14, single buffered']
    #allocation26 [shape = 'u8[65536]{0}', space=vmem, size = 0x10000, scoped, tag = 'input window, operand 15, single buffered']
    #allocation27 [shape = 's32[1]{0}', space=sflag, size = 0x4, scoped, tag = 'scoped memory for improved_dnn_forward.1']
    #allocation28 [shape = 'u8[512]{0}', space=vmem, size = 0x400, scoped, tag = 'input window, operand 16, single buffered']
    #allocation29 [shape = 'u8[65536]{0}', space=vmem, size = 0x10000, scoped, tag = 'input window, operand 17, single buffered']
    #allocation30 [shape = 's32[1]{0}', space=sflag, size = 0x4, scoped, tag = 'scoped memory for improved_dnn_forward.1']
    #allocation31 [shape = 'u8[512]{0}', space=vmem, size = 0x400, scoped, tag = 'input window, operand 18, single buffered']
    #allocation32 [shape = 'u8[4096]{0}', space=vmem, size = 0x1000, scoped, tag = 'output window, operand 0, single buffered']
    %24 = vsyncpa [#allocation3], 0
    %25 = vsyncpa [#allocation6], 0
    %26 = vsyncpa [#allocation9], 0
    %27 = vsyncpa [#allocation12], 0
    %28 = vsyncpa [#allocation15], 0
    %29 = vsyncpa [#allocation18], 0
    %30 = vsyncpa [#allocation21], 0
    %31 = vsyncpa [#allocation24], 0
    %32 = vsyncpa [#allocation27], 0
    %33 = vsyncpa [#allocation30], 0
    %34 = vsyncpa [#allocation4], 0
    // Predicated region
    $region2: #{improved_dnn_forward.1} parent=1 // pred_check
      _
    $region3: #{improved_dnn_forward.1} parent=1 // pred_check_branch
      %36 = sbr.rel (0) target = $region5
    $region4: #{improved_dnn_forward.1} parent=1 // pred_region
      %s38 = ssub.s32 128, 128
      %39 = vsyncadd [#allocation3], %s38
      %s41 = sshll.u32 [#allocation2], 4
      %s42 = int_to_ptr.vmem [resolvable:$true] %s41
      %44 = dma.hbm_to_vmem [thread:$0]  %s0, 128, %s42, [#allocation3]
    $region5: #{improved_dnn_forward.1} parent=1 // pred_fallthru
      _
    // Predicated region
    $region6: #{improved_dnn_forward.1} parent=1 // pred_check
      _
    $region7: #{improved_dnn_forward.1} parent=1 // pred_check_branch
      %46 = sbr.rel (0) target = $region9
    $region8: #{improved_dnn_forward.1} parent=1 // pred_region
      %s48 = ssub.s32 2048, 2048
      %49 = vsyncadd [#allocation6], %s48
      %s50 = sshll.u32 [#allocation5], 4
      %s51 = int_to_ptr.vmem [resolvable:$true] %s50
      %56 = dma.hbm_to_vmem [thread:$0]  %s1, 2048, %s51, [#allocation6], 128, 128, 8
    $region9: #{improved_dnn_forward.1} parent=1 // pred_fallthru
      _
    // Predicated region
    $region10: #{improved_dnn_forward.1} parent=1 // pred_check
      _
    $region11: #{improved_dnn_forward.1} parent=1 // pred_check_branch
      %58 = sbr.rel (0) target = $region13
    $region12: #{improved_dnn_forward.1} parent=1 // pred_region
      %s60 = ssub.s32 16, 16
      %61 = vsyncadd [#allocation6], %s60
      %s63 = sshll.u32 [#allocation7], 4
      %s64 = int_to_ptr.vmem [resolvable:$true] %s63
      %66 = dma.hbm_to_vmem [thread:$0]  %s2, 16, %s64, [#allocation6]
    $region13: #{improved_dnn_forward.1} parent=1 // pred_fallthru
      _
    // Predicated region
    $region14: #{improved_dnn_forward.1} parent=1 // pred_check
      _
    $region15: #{improved_dnn_forward.1} parent=1 // pred_check_branch
      %68 = sbr.rel (0) target = $region17
    $region16: #{improved_dnn_forward.1} parent=1 // pred_region
      %s70 = ssub.s32 2048, 2048
      %71 = vsyncadd [#allocation9], %s70
      %s72 = sshll.u32 [#allocation8], 4
      %s73 = int_to_ptr.vmem [resolvable:$true] %s72
      %78 = dma.hbm_to_vmem [thread:$0]  %s3, 2048, %s73, [#allocation9], 128, 128, 8
    $region17: #{improved_dnn_forward.1} parent=1 // pred_fallthru
      _
    // Predicated region
    $region18: #{improved_dnn_forward.1} parent=1 // pred_check
      _
    $region19: #{improved_dnn_forward.1} parent=1 // pred_check_branch
      %80 = sbr.rel (0) target = $region21
    $region20: #{improved_dnn_forward.1} parent=1 // pred_region
      %s82 = ssub.s32 16, 16
      %83 = vsyncadd [#allocation9], %s82
      %s85 = sshll.u32 [#allocation10], 4
      %s86 = int_to_ptr.vmem [resolvable:$true] %s85
      %88 = dma.hbm_to_vmem [thread:$0]  %s4, 16, %s86, [#allocation9]
    $region21: #{improved_dnn_forward.1} parent=1 // pred_fallthru
      _
    // Predicated region
    $region22: #{improved_dnn_forward.1} parent=1 // pred_check
      _
    $region23: #{improved_dnn_forward.1} parent=1 // pred_check_branch
      %90 = sbr.rel (0) target = $region25
    $region24: #{improved_dnn_forward.1} parent=1 // pred_region
      %s92 = ssub.s32 2048, 2048
      %93 = vsyncadd [#allocation12], %s92
      %s94 = sshll.u32 [#allocation11], 4
      %s95 = int_to_ptr.vmem [resolvable:$true] %s94
      %100 = dma.hbm_to_vmem [thread:$0]  %s5, 2048, %s95, [#allocation12], 128, 128, 8
    $region25: #{improved_dnn_forward.1} parent=1 // pred_fallthru
      _
    // Predicated region
    $region26: #{improved_dnn_forward.1} parent=1 // pred_check
      _
    $region27: #{improved_dnn_forward.1} parent=1 // pred_check_branch
      %102 = sbr.rel (0) target = $region29
    $region28: #{improved_dnn_forward.1} parent=1 // pred_region
      %s104 = ssub.s32 16, 16
      %105 = vsyncadd [#allocation12], %s104
      %s107 = sshll.u32 [#allocation13], 4
      %s108 = int_to_ptr.vmem [resolvable:$true] %s107
      %110 = dma.hbm_to_vmem [thread:$0]  %s6, 16, %s108, [#allocation12]
    $region29: #{improved_dnn_forward.1} parent=1 // pred_fallthru
      _
    // Predicated region
    $region30: #{improved_dnn_forward.1} parent=1 // pred_check
      _
    $region31: #{improved_dnn_forward.1} parent=1 // pred_check_branch
      %112 = sbr.rel (0) target = $region33
    $region32: #{improved_dnn_forward.1} parent=1 // pred_region
      %s114 = ssub.s32 2048, 2048
      %115 = vsyncadd [#allocation15], %s114
      %s116 = sshll.u32 [#allocation14], 4
      %s117 = int_to_ptr.vmem [resolvable:$true] %s116
      %122 = dma.hbm_to_vmem [thread:$0]  %s7, 2048, %s117, [#allocation15], 128, 128, 8
    $region33: #{improved_dnn_forward.1} parent=1 // pred_fallthru
      _
    // Predicated region
    $region34: #{improved_dnn_forward.1} parent=1 // pred_check
      _
    $region35: #{improved_dnn_forward.1} parent=1 // pred_check_branch
      %124 = sbr.rel (0) target = $region37
    $region36: #{improved_dnn_forward.1} parent=1 // pred_region
      %s126 = ssub.s32 16, 16
      %127 = vsyncadd [#allocation15], %s126
      %s129 = sshll.u32 [#allocation16], 4
      %s130 = int_to_ptr.vmem [resolvable:$true] %s129
      %132 = dma.hbm_to_vmem [thread:$0]  %s8, 16, %s130, [#allocation15]
    $region37: #{improved_dnn_forward.1} parent=1 // pred_fallthru
      _
    // Predicated region
    $region38: #{improved_dnn_forward.1} parent=1 // pred_check
      _
    $region39: #{improved_dnn_forward.1} parent=1 // pred_check_branch
      %134 = sbr.rel (0) target = $region41
    $region40: #{improved_dnn_forward.1} parent=1 // pred_region
      %s136 = ssub.s32 2048, 2048
      %137 = vsyncadd [#allocation18], %s136
      %s138 = sshll.u32 [#allocation17], 4
      %s139 = int_to_ptr.vmem [resolvable:$true] %s138
      %144 = dma.hbm_to_vmem [thread:$0]  %s9, 2048, %s139, [#allocation18], 128, 128, 8
    $region41: #{improved_dnn_forward.1} parent=1 // pred_fallthru
      _
    // Predicated region
    $region42: #{improved_dnn_forward.1} parent=1 // pred_check
      _
    $region43: #{improved_dnn_forward.1} parent=1 // pred_check_branch
      %146 = sbr.rel (0) target = $region45
    $region44: #{improved_dnn_forward.1} parent=1 // pred_region
      %s148 = ssub.s32 16, 16
      %149 = vsyncadd [#allocation18], %s148
      %s151 = sshll.u32 [#allocation19], 4
      %s152 = int_to_ptr.vmem [resolvable:$true] %s151
      %154 = dma.hbm_to_vmem [thread:$0]  %s10, 16, %s152, [#allocation18]
    $region45: #{improved_dnn_forward.1} parent=1 // pred_fallthru
      _
    // Predicated region
    $region46: #{improved_dnn_forward.1} parent=1 // pred_check
      _
    $region47: #{improved_dnn_forward.1} parent=1 // pred_check_branch
      %156 = sbr.rel (0) target = $region49
    $region48: #{improved_dnn_forward.1} parent=1 // pred_region
      %s158 = ssub.s32 2048, 2048
      %159 = vsyncadd [#allocation21], %s158
      %s160 = sshll.u32 [#allocation20], 4
      %s161 = int_to_ptr.vmem [resolvable:$true] %s160
      %166 = dma.hbm_to_vmem [thread:$0]  %s11, 2048, %s161, [#allocation21], 128, 128, 8
    $region49: #{improved_dnn_forward.1} parent=1 // pred_fallthru
      _
    // Predicated region
    $region50: #{improved_dnn_forward.1} parent=1 // pred_check
      _
    $region51: #{improved_dnn_forward.1} parent=1 // pred_check_branch
      %168 = sbr.rel (0) target = $region53
    $region52: #{improved_dnn_forward.1} parent=1 // pred_region
      %s170 = ssub.s32 16, 16
      %171 = vsyncadd [#allocation21], %s170
      %s173 = sshll.u32 [#allocation22], 4
      %s174 = int_to_ptr.vmem [resolvable:$true] %s173
      %176 = dma.hbm_to_vmem [thread:$0]  %s12, 16, %s174, [#allocation21]
    $region53: #{improved_dnn_forward.1} parent=1 // pred_fallthru
      _
    // Predicated region
    $region54: #{improved_dnn_forward.1} parent=1 // pred_check
      _
    $region55: #{improved_dnn_forward.1} parent=1 // pred_check_branch
      %178 = sbr.rel (0) target = $region57
    $region56: #{improved_dnn_forward.1} parent=1 // pred_region
      %s180 = ssub.s32 2048, 2048
      %181 = vsyncadd [#allocation24], %s180
      %s182 = sshll.u32 [#allocation23], 4
      %s183 = int_to_ptr.vmem [resolvable:$true] %s182
      %188 = dma.hbm_to_vmem [thread:$0]  %s13, 2048, %s183, [#allocation24], 128, 128, 8
    $region57: #{improved_dnn_forward.1} parent=1 // pred_fallthru
      _
    // Predicated region
    $region58: #{improved_dnn_forward.1} parent=1 // pred_check
      _
    $region59: #{improved_dnn_forward.1} parent=1 // pred_check_branch
      %190 = sbr.rel (0) target = $region61
    $region60: #{improved_dnn_forward.1} parent=1 // pred_region
      %s192 = ssub.s32 16, 16
      %193 = vsyncadd [#allocation24], %s192
      %s195 = sshll.u32 [#allocation25], 4
      %s196 = int_to_ptr.vmem [resolvable:$true] %s195
      %198 = dma.hbm_to_vmem [thread:$0]  %s14, 16, %s196, [#allocation24]
    $region61: #{improved_dnn_forward.1} parent=1 // pred_fallthru
      _
    // Predicated region
    $region62: #{improved_dnn_forward.1} parent=1 // pred_check
      _
    $region63: #{improved_dnn_forward.1} parent=1 // pred_check_branch
      %200 = sbr.rel (0) target = $region65
    $region64: #{improved_dnn_forward.1} parent=1 // pred_region
      %s202 = ssub.s32 2048, 2048
      %203 = vsyncadd [#allocation27], %s202
      %s204 = sshll.u32 [#allocation26], 4
      %s205 = int_to_ptr.vmem [resolvable:$true] %s204
      %210 = dma.hbm_to_vmem [thread:$0]  %s15, 2048, %s205, [#allocation27], 128, 128, 8
    $region65: #{improved_dnn_forward.1} parent=1 // pred_fallthru
      _
    // Predicated region
    $region66: #{improved_dnn_forward.1} parent=1 // pred_check
      _
    $region67: #{improved_dnn_forward.1} parent=1 // pred_check_branch
      %212 = sbr.rel (0) target = $region69
    $region68: #{improved_dnn_forward.1} parent=1 // pred_region
      %s214 = ssub.s32 16, 16
      %215 = vsyncadd [#allocation27], %s214
      %s217 = sshll.u32 [#allocation28], 4
      %s218 = int_to_ptr.vmem [resolvable:$true] %s217
      %220 = dma.hbm_to_vmem [thread:$0]  %s16, 16, %s218, [#allocation27]
    $region69: #{improved_dnn_forward.1} parent=1 // pred_fallthru
      _
    // Predicated region
    $region70: #{improved_dnn_forward.1} parent=1 // pred_check
      _
    $region71: #{improved_dnn_forward.1} parent=1 // pred_check_branch
      %222 = sbr.rel (0) target = $region73
    $region72: #{improved_dnn_forward.1} parent=1 // pred_region
      %s224 = ssub.s32 2048, 2048
      %225 = vsyncadd [#allocation30], %s224
      %s226 = sshll.u32 [#allocation29], 4
      %s227 = int_to_ptr.vmem [resolvable:$true] %s226
      %232 = dma.hbm_to_vmem [thread:$0]  %s17, 2048, %s227, [#allocation30], 128, 128, 8
    $region73: #{improved_dnn_forward.1} parent=1 // pred_fallthru
      _
    // Predicated region
    $region74: #{improved_dnn_forward.1} parent=1 // pred_check
      _
    $region75: #{improved_dnn_forward.1} parent=1 // pred_check_branch
      %234 = sbr.rel (0) target = $region77
    $region76: #{improved_dnn_forward.1} parent=1 // pred_region
      %s236 = ssub.s32 16, 16
      %237 = vsyncadd [#allocation30], %s236
      %s239 = sshll.u32 [#allocation31], 4
      %s240 = int_to_ptr.vmem [resolvable:$true] %s239
      %242 = dma.hbm_to_vmem [thread:$0]  %s18, 16, %s240, [#allocation30]
    $region77: #{improved_dnn_forward.1} parent=1 // pred_fallthru
      _
    // Predicated region
    $region78: #{improved_dnn_forward.1} parent=1 // pred_check
      _
    $region79: #{improved_dnn_forward.1} parent=1 // pred_check_branch
      %244 = sbr.rel (0) target = $region81
    $region80: #{improved_dnn_forward.1} parent=1 // pred_region
      %245 = dma.done [#allocation3], 128
    $region81: #{improved_dnn_forward.1} parent=1 // pred_fallthru
      _
    // Predicated region
    $region82: #{improved_dnn_forward.1} parent=1 // pred_check
      _
    $region83: #{improved_dnn_forward.1} parent=1 // pred_check_branch
      %247 = sbr.rel (0) target = $region85
    $region84: #{improved_dnn_forward.1} parent=1 // pred_region
      %248 = dma.done [#allocation6], 2048
    $region85: #{improved_dnn_forward.1} parent=1 // pred_fallthru
      _
    // Predicated region
    $region86: #{improved_dnn_forward.1} parent=1 // pred_check
      _
    $region87: #{improved_dnn_forward.1} parent=1 // pred_check_branch
      %250 = sbr.rel (0) target = $region89
    $region88: #{improved_dnn_forward.1} parent=1 // pred_region
      %251 = dma.done [#allocation6], 16
    $region89: #{improved_dnn_forward.1} parent=1 // pred_fallthru
      _
    // Predicated region
    $region90: #{improved_dnn_forward.1} parent=1 // pred_check
      _
    $region91: #{improved_dnn_forward.1} parent=1 // pred_check_branch
      %253 = sbr.rel (0) target = $region93
    $region92: #{improved_dnn_forward.1} parent=1 // pred_region
      %254 = dma.done [#allocation9], 2048
    $region93: #{improved_dnn_forward.1} parent=1 // pred_fallthru
      _
    // Predicated region
    $region94: #{improved_dnn_forward.1} parent=1 // pred_check
      _
    $region95: #{improved_dnn_forward.1} parent=1 // pred_check_branch
      %256 = sbr.rel (0) target = $region97
    $region96: #{improved_dnn_forward.1} parent=1 // pred_region
      %257 = dma.done [#allocation9], 16
    $region97: #{improved_dnn_forward.1} parent=1 // pred_fallthru
      _
    // Predicated region
    $region98: #{improved_dnn_forward.1} parent=1 // pred_check
      _
    $region99: #{improved_dnn_forward.1} parent=1 // pred_check_branch
      %259 = sbr.rel (0) target = $region101
    $region100: #{improved_dnn_forward.1} parent=1 // pred_region
      %260 = dma.done [#allocation12], 2048
    $region101: #{improved_dnn_forward.1} parent=1 // pred_fallthru
      _
    // Predicated region
    $region102: #{improved_dnn_forward.1} parent=1 // pred_check
      _
    $region103: #{improved_dnn_forward.1} parent=1 // pred_check_branch
      %262 = sbr.rel (0) target = $region105
    $region104: #{improved_dnn_forward.1} parent=1 // pred_region
      %263 = dma.done [#allocation12], 16
    $region105: #{improved_dnn_forward.1} parent=1 // pred_fallthru
      _
    // Predicated region
    $region106: #{improved_dnn_forward.1} parent=1 // pred_check
      _
    $region107: #{improved_dnn_forward.1} parent=1 // pred_check_branch
      %265 = sbr.rel (0) target = $region109
    $region108: #{improved_dnn_forward.1} parent=1 // pred_region
      %266 = dma.done [#allocation15], 2048
    $region109: #{improved_dnn_forward.1} parent=1 // pred_fallthru
      _
    // Predicated region
    $region110: #{improved_dnn_forward.1} parent=1 // pred_check
      _
    $region111: #{improved_dnn_forward.1} parent=1 // pred_check_branch
      %268 = sbr.rel (0) target = $region113
    $region112: #{improved_dnn_forward.1} parent=1 // pred_region
      %269 = dma.done [#allocation15], 16
    $region113: #{improved_dnn_forward.1} parent=1 // pred_fallthru
      _
    // Predicated region
    $region114: #{improved_dnn_forward.1} parent=1 // pred_check
      _
    $region115: #{improved_dnn_forward.1} parent=1 // pred_check_branch
      %271 = sbr.rel (0) target = $region117
    $region116: #{improved_dnn_forward.1} parent=1 // pred_region
      %272 = dma.done [#allocation18], 2048
    $region117: #{improved_dnn_forward.1} parent=1 // pred_fallthru
      _
    // Predicated region
    $region118: #{improved_dnn_forward.1} parent=1 // pred_check
      _
    $region119: #{improved_dnn_forward.1} parent=1 // pred_check_branch
      %274 = sbr.rel (0) target = $region121
    $region120: #{improved_dnn_forward.1} parent=1 // pred_region
      %275 = dma.done [#allocation18], 16
    $region121: #{improved_dnn_forward.1} parent=1 // pred_fallthru
      _
    // Predicated region
    $region122: #{improved_dnn_forward.1} parent=1 // pred_check
      _
    $region123: #{improved_dnn_forward.1} parent=1 // pred_check_branch
      %277 = sbr.rel (0) target = $region125
    $region124: #{improved_dnn_forward.1} parent=1 // pred_region
      %278 = dma.done [#allocation21], 2048
    $region125: #{improved_dnn_forward.1} parent=1 // pred_fallthru
      _
    // Predicated region
    $region126: #{improved_dnn_forward.1} parent=1 // pred_check
      _
    $region127: #{improved_dnn_forward.1} parent=1 // pred_check_branch
      %280 = sbr.rel (0) target = $region129
    $region128: #{improved_dnn_forward.1} parent=1 // pred_region
      %281 = dma.done [#allocation21], 16
    $region129: #{improved_dnn_forward.1} parent=1 // pred_fallthru
      _
    // Predicated region
    $region130: #{improved_dnn_forward.1} parent=1 // pred_check
      _
    $region131: #{improved_dnn_forward.1} parent=1 // pred_check_branch
      %283 = sbr.rel (0) target = $region133
    $region132: #{improved_dnn_forward.1} parent=1 // pred_region
      %284 = dma.done [#allocation24], 2048
    $region133: #{improved_dnn_forward.1} parent=1 // pred_fallthru
      _
    // Predicated region
    $region134: #{improved_dnn_forward.1} parent=1 // pred_check
      _
    $region135: #{improved_dnn_forward.1} parent=1 // pred_check_branch
      %286 = sbr.rel (0) target = $region137
    $region136: #{improved_dnn_forward.1} parent=1 // pred_region
      %287 = dma.done [#allocation24], 16
    $region137: #{improved_dnn_forward.1} parent=1 // pred_fallthru
      _
    // Predicated region
    $region138: #{improved_dnn_forward.1} parent=1 // pred_check
      _
    $region139: #{improved_dnn_forward.1} parent=1 // pred_check_branch
      %289 = sbr.rel (0) target = $region141
    $region140: #{improved_dnn_forward.1} parent=1 // pred_region
      %290 = dma.done [#allocation27], 2048
    $region141: #{improved_dnn_forward.1} parent=1 // pred_fallthru
      _
    // Predicated region
    $region142: #{improved_dnn_forward.1} parent=1 // pred_check
      _
    $region143: #{improved_dnn_forward.1} parent=1 // pred_check_branch
      %292 = sbr.rel (0) target = $region145
    $region144: #{improved_dnn_forward.1} parent=1 // pred_region
      %293 = dma.done [#allocation27], 16
    $region145: #{improved_dnn_forward.1} parent=1 // pred_fallthru
      _
    // Predicated region
    $region146: #{improved_dnn_forward.1} parent=1 // pred_check
      _
    $region147: #{improved_dnn_forward.1} parent=1 // pred_check_branch
      %295 = sbr.rel (0) target = $region149
    $region148: #{improved_dnn_forward.1} parent=1 // pred_region
      %296 = dma.done [#allocation30], 2048
    $region149: #{improved_dnn_forward.1} parent=1 // pred_fallthru
      _
    // Predicated region
    $region150: #{improved_dnn_forward.1} parent=1 // pred_check
      _
    $region151: #{improved_dnn_forward.1} parent=1 // pred_check_branch
      %298 = sbr.rel (0) target = $region153
    $region152: #{improved_dnn_forward.1} parent=1 // pred_region
      %299 = dma.done [#allocation30], 16
    $region153: #{improved_dnn_forward.1} parent=1 // pred_fallthru
      _
    %v300 = vld [vmem:[#allocation2] sm:$0xff]
    %v301 = vld [vmem:[#allocation5] sm:$0xff]
    %v302 = vld [vmem:[#allocation5 + $0x8] sm:$0xff]
    %v303 = vld [vmem:[#allocation5 + $0x10] sm:$0xff]
    %v304 = vld [vmem:[#allocation5 + $0x18] sm:$0xff]
    %v305 = vld [vmem:[#allocation5 + $0x20] sm:$0xff]
    %v306 = vld [vmem:[#allocation5 + $0x28] sm:$0xff]
    %v307 = vld [vmem:[#allocation5 + $0x30] sm:$0xff]
    %v308 = vld [vmem:[#allocation5 + $0x38] sm:$0xff]
    %v309 = vld [vmem:[#allocation5 + $0x40] sm:$0xff]
    %v310 = vld [vmem:[#allocation5 + $0x48] sm:$0xff]
    %v311 = vld [vmem:[#allocation5 + $0x50] sm:$0xff]
    %v312 = vld [vmem:[#allocation5 + $0x58] sm:$0xff]
    %v313 = vld [vmem:[#allocation5 + $0x60] sm:$0xff]
    %v314 = vld [vmem:[#allocation5 + $0x68] sm:$0xff]
    %v315 = vld [vmem:[#allocation5 + $0x70] sm:$0xff]
    %v316 = vld [vmem:[#allocation5 + $0x78] sm:$0xff]
    %v317 = vld [vmem:[#allocation7] sm:$0x1]
    %v319 = vlaneseq
    %v320 = vshrl.u32 %v319, 7
    %v321 = vsub.s32 0, %v320
    %v322 = vrot.slane %v317, %v321
    %324 = vmatprep.subr.mxu0 0.0
    %325 = vmatpush1.msra.mxu0 %v301
    %326 = vmatprep.subr.mxu0 0.0
    %327 = vmatpush1.msra.mxu0 %v302
    %328 = vmatprep.subr.mxu0 0.0
    %329 = vmatpush1.msra.mxu0 %v303
    %330 = vmatprep.subr.mxu0 0.0
    %331 = vmatpush1.msra.mxu0 %v304
    %332 = vmatprep.subr.mxu0 0.0
    %333 = vmatpush1.msra.mxu0 %v305
    %334 = vmatprep.subr.mxu0 0.0
    %335 = vmatpush1.msra.mxu0 %v306
    %336 = vmatprep.subr.mxu0 0.0
    %337 = vmatpush1.msra.mxu0 %v307
    %338 = vmatprep.subr.mxu0 0.0
    %339 = vmatpush1.msra.mxu0 %v308
    %340 = vmatprep.subr.mxu0 0.0
    %341 = vmatpush1.msra.mxu0 %v309
    %342 = vmatprep.subr.mxu0 0.0
    %343 = vmatpush1.msra.mxu0 %v310
    %344 = vmatprep.subr.mxu0 0.0
    %345 = vmatpush1.msra.mxu0 %v311
    %346 = vmatprep.subr.mxu0 0.0
    %347 = vmatpush1.msra.mxu0 %v312
    %348 = vmatprep.subr.mxu0 0.0
    %349 = vmatpush1.msra.mxu0 %v313
    %350 = vmatprep.subr.mxu0 0.0
    %351 = vmatpush1.msra.mxu0 %v314
    %352 = vmatprep.subr.mxu0 0.0
    %353 = vmatpush1.msra.mxu0 %v315
    %354 = vmatprep.subr.mxu0 0.0
    %355 = vmatpush1.msra.mxu0 %v316
    %356 = vmatprep.subr.mxu0 0.0
    %357 = vmatpush1.msra.mxu0 0.0
    %358 = vmatprep.subr.mxu0 0.0
    %359 = vmatpush1.msra.mxu0 0.0
    %360 = vmatprep.subr.mxu0 0.0
    %361 = vmatpush1.msra.mxu0 0.0
    %362 = vmatprep.subr.mxu0 0.0
    %363 = vmatpush1.msra.mxu0 0.0
    %364 = vmatprep.subr.mxu0 0.0
    %365 = vmatpush1.msra.mxu0 0.0
    %366 = vmatprep.subr.mxu0 0.0
    %367 = vmatpush1.msra.mxu0 0.0
    %368 = vmatprep.subr.mxu0 0.0
    %369 = vmatpush1.msra.mxu0 0.0
    %370 = vmatprep.subr.mxu0 0.0
    %371 = vmatpush1.msra.mxu0 0.0
    %372 = vmatprep.subr.mxu0 0.0
    %373 = vmatpush1.msra.mxu0 0.0
    %374 = vmatprep.subr.mxu0 0.0
    %375 = vmatpush1.msra.mxu0 0.0
    %376 = vmatprep.subr.mxu0 0.0
    %377 = vmatpush1.msra.mxu0 0.0
    %378 = vmatprep.subr.mxu0 0.0
    %379 = vmatpush1.msra.mxu0 0.0
    %380 = vmatprep.subr.mxu0 0.0
    %381 = vmatpush1.msra.mxu0 0.0
    %382 = vmatprep.subr.mxu0 0.0
    %383 = vmatpush1.msra.mxu0 0.0
    %384 = vmatprep.subr.mxu0 0.0
    %385 = vmatpush1.msra.mxu0 0.0
    %386 = vmatprep.subr.mxu0 0.0
    %387 = vmatpush1.msra.mxu0 0.0
    %388 = vmatprep.mubr.f32.mxu0 0.0
    %389 = vmatmul.mubr.f32.gmra.mrb[0].mxu0 %v300
    %v390 = vpop.f32.mrb[0].mxu0
    %v391 = vadd.f32 %v322, %v390
    %v392 = vpop.f32.mrb[0].mxu0
    %393 = vdwg.mxu0
    %v394 = vrot.slane %v391, 4
    %v395 = vadd.f32 %v391, %v394
    %v396 = vrot.slane %v395, 2
    %v397 = vadd.f32 %v395, %v396
    %v398 = vrot.slane %v397, 1
    %v399 = vadd.f32 %v397, %v398
    %v400 = vrcp.pop 8.0
    %v401 = vmul.f32 %v399, %v400
    %v402 = vsub.f32 %v391, %v401
    %v403 = vmul.f32 %v402, %v402
    %v404 = vrot.slane %v403, 4
    %v405 = vadd.f32 %v403, %v404
    %v406 = vrot.slane %v405, 2
    %v407 = vadd.f32 %v405, %v406
    %v408 = vrot.slane %v407, 1
    %v409 = vadd.f32 %v407, %v408
    %v410 = vmul.f32 %v409, %v400
    %v411 = vadd.f32 %v410, 1e-05
    %v412 = vrsqrt.pop %v411
    %v413 = vmul.f32 %v402, %v412
    %v414 = vmul.f32 %v413, 0.5
    %v415 = vmul.f32 %v413, 0.70710677
    %v416 = verf.f32.pop %v415
    %v417 = vadd.f32 %v416, 1.0
    %v418 = vmul.f32 %v414, %v417
    %v419 = vld [vmem:[#allocation8] sm:$0xff]
    %v420 = vld [vmem:[#allocation8 + $0x8] sm:$0xff]
    %v421 = vld [vmem:[#allocation8 + $0x10] sm:$0xff]
    %v422 = vld [vmem:[#allocation8 + $0x18] sm:$0xff]
    %v423 = vld [vmem:[#allocation8 + $0x20] sm:$0xff]
    %v424 = vld [vmem:[#allocation8 + $0x28] sm:$0xff]
    %v425 = vld [vmem:[#allocation8 + $0x30] sm:$0xff]
    %v426 = vld [vmem:[#allocation8 + $0x38] sm:$0xff]
    %v427 = vld [vmem:[#allocation8 + $0x40] sm:$0xff]
    %v428 = vld [vmem:[#allocation8 + $0x48] sm:$0xff]
    %v429 = vld [vmem:[#allocation8 + $0x50] sm:$0xff]
    %v430 = vld [vmem:[#allocation8 + $0x58] sm:$0xff]
    %v431 = vld [vmem:[#allocation8 + $0x60] sm:$0xff]
    %v432 = vld [vmem:[#allocation8 + $0x68] sm:$0xff]
    %v433 = vld [vmem:[#allocation8 + $0x70] sm:$0xff]
    %v434 = vld [vmem:[#allocation8 + $0x78] sm:$0xff]
    %v435 = vld [vmem:[#allocation10] sm:$0x1]
    %v437 = vlaneseq
    %v438 = vshrl.u32 %v437, 7
    %v439 = vsub.s32 0, %v438
    %v440 = vrot.slane %v435, %v439
    %442 = vmatprep.subr.mxu0 0.0
    %443 = vmatpush1.msra.mxu0 %v419
    %444 = vmatprep.subr.mxu0 0.0
    %445 = vmatpush1.msra.mxu0 %v420
    %446 = vmatprep.subr.mxu0 0.0
    %447 = vmatpush1.msra.mxu0 %v421
    %448 = vmatprep.subr.mxu0 0.0
    %449 = vmatpush1.msra.mxu0 %v422
    %450 = vmatprep.subr.mxu0 0.0
    %451 = vmatpush1.msra.mxu0 %v423
    %452 = vmatprep.subr.mxu0 0.0
    %453 = vmatpush1.msra.mxu0 %v424
    %454 = vmatprep.subr.mxu0 0.0
    %455 = vmatpush1.msra.mxu0 %v425
    %456 = vmatprep.subr.mxu0 0.0
    %457 = vmatpush1.msra.mxu0 %v426
    %458 = vmatprep.subr.mxu0 0.0
    %459 = vmatpush1.msra.mxu0 %v427
    %460 = vmatprep.subr.mxu0 0.0
    %461 = vmatpush1.msra.mxu0 %v428
    %462 = vmatprep.subr.mxu0 0.0
    %463 = vmatpush1.msra.mxu0 %v429
    %464 = vmatprep.subr.mxu0 0.0
    %465 = vmatpush1.msra.mxu0 %v430
    %466 = vmatprep.subr.mxu0 0.0
    %467 = vmatpush1.msra.mxu0 %v431
    %468 = vmatprep.subr.mxu0 0.0
    %469 = vmatpush1.msra.mxu0 %v432
    %470 = vmatprep.subr.mxu0 0.0
    %471 = vmatpush1.msra.mxu0 %v433
    %472 = vmatprep.subr.mxu0 0.0
    %473 = vmatpush1.msra.mxu0 %v434
    %474 = vmatprep.subr.mxu0 0.0
    %475 = vmatpush1.msra.mxu0 0.0
    %476 = vmatprep.subr.mxu0 0.0
    %477 = vmatpush1.msra.mxu0 0.0
    %478 = vmatprep.subr.mxu0 0.0
    %479 = vmatpush1.msra.mxu0 0.0
    %480 = vmatprep.subr.mxu0 0.0
    %481 = vmatpush1.msra.mxu0 0.0
    %482 = vmatprep.subr.mxu0 0.0
    %483 = vmatpush1.msra.mxu0 0.0
    %484 = vmatprep.subr.mxu0 0.0
    %485 = vmatpush1.msra.mxu0 0.0
    %486 = vmatprep.subr.mxu0 0.0
    %487 = vmatpush1.msra.mxu0 0.0
    %488 = vmatprep.subr.mxu0 0.0
    %489 = vmatpush1.msra.mxu0 0.0
    %490 = vmatprep.subr.mxu0 0.0
    %491 = vmatpush1.msra.mxu0 0.0
    %492 = vmatprep.subr.mxu0 0.0
    %493 = vmatpush1.msra.mxu0 0.0
    %494 = vmatprep.subr.mxu0 0.0
    %495 = vmatpush1.msra.mxu0 0.0
    %496 = vmatprep.subr.mxu0 0.0
    %497 = vmatpush1.msra.mxu0 0.0
    %498 = vmatprep.subr.mxu0 0.0
    %499 = vmatpush1.msra.mxu0 0.0
    %500 = vmatprep.subr.mxu0 0.0
    %501 = vmatpush1.msra.mxu0 0.0
    %502 = vmatprep.subr.mxu0 0.0
    %503 = vmatpush1.msra.mxu0 0.0
    %504 = vmatprep.subr.mxu0 0.0
    %505 = vmatpush1.msra.mxu0 0.0
    %506 = vmatprep.mubr.f32.mxu0 0.0
    %507 = vmatmul.mubr.f32.gmra.mrb[0].mxu0 %v418
    %v508 = vpop.f32.mrb[0].mxu0
    %v509 = vadd.f32 %v440, %v508
    %v510 = vpop.f32.mrb[0].mxu0
    %511 = vdwg.mxu0
    %v512 = vrot.slane %v509, 4
    %v513 = vadd.f32 %v509, %v512
    %v514 = vrot.slane %v513, 2
    %v515 = vadd.f32 %v513, %v514
    %v516 = vrot.slane %v515, 1
    %v517 = vadd.f32 %v515, %v516
    %v518 = vmul.f32 %v517, %v400
    %v519 = vsub.f32 %v509, %v518
    %v520 = vmul.f32 %v519, %v519
    %v521 = vrot.slane %v520, 4
    %v522 = vadd.f32 %v520, %v521
    %v523 = vrot.slane %v522, 2
    %v524 = vadd.f32 %v522, %v523
    %v525 = vrot.slane %v524, 1
    %v526 = vadd.f32 %v524, %v525
    %v527 = vmul.f32 %v526, %v400
    %v528 = vadd.f32 %v527, 1e-05
    %v529 = vrsqrt.pop %v528
    %v530 = vmul.f32 %v519, %v529
    %v531 = vmul.f32 %v530, 0.5
    %v532 = vmul.f32 %v530, 0.70710677
    %v533 = verf.f32.pop %v532
    %v534 = vadd.f32 %v533, 1.0
    %v535 = vmul.f32 %v531, %v534
    %v536 = vld [vmem:[#allocation11] sm:$0xff]
    %v537 = vld [vmem:[#allocation11 + $0x8] sm:$0xff]
    %v538 = vld [vmem:[#allocation11 + $0x10] sm:$0xff]
    %v539 = vld [vmem:[#allocation11 + $0x18] sm:$0xff]
    %v540 = vld [vmem:[#allocation11 + $0x20] sm:$0xff]
    %v541 = vld [vmem:[#allocation11 + $0x28] sm:$0xff]
    %v542 = vld [vmem:[#allocation11 + $0x30] sm:$0xff]
    %v543 = vld [vmem:[#allocation11 + $0x38] sm:$0xff]
    %v544 = vld [vmem:[#allocation11 + $0x40] sm:$0xff]
    %v545 = vld [vmem:[#allocation11 + $0x48] sm:$0xff]
    %v546 = vld [vmem:[#allocation11 + $0x50] sm:$0xff]
    %v547 = vld [vmem:[#allocation11 + $0x58] sm:$0xff]
    %v548 = vld [vmem:[#allocation11 + $0x60] sm:$0xff]
    %v549 = vld [vmem:[#allocation11 + $0x68] sm:$0xff]
    %v550 = vld [vmem:[#allocation11 + $0x70] sm:$0xff]
    %v551 = vld [vmem:[#allocation11 + $0x78] sm:$0xff]
    %v552 = vld [vmem:[#allocation13] sm:$0x1]
    %v554 = vlaneseq
    %v555 = vshrl.u32 %v554, 7
    %v556 = vsub.s32 0, %v555
    %v557 = vrot.slane %v552, %v556
    %559 = vmatprep.subr.mxu0 0.0
    %560 = vmatpush1.msra.mxu0 %v536
    %561 = vmatprep.subr.mxu0 0.0
    %562 = vmatpush1.msra.mxu0 %v537
    %563 = vmatprep.subr.mxu0 0.0
    %564 = vmatpush1.msra.mxu0 %v538
    %565 = vmatprep.subr.mxu0 0.0
    %566 = vmatpush1.msra.mxu0 %v539
    %567 = vmatprep.subr.mxu0 0.0
    %568 = vmatpush1.msra.mxu0 %v540
    %569 = vmatprep.subr.mxu0 0.0
    %570 = vmatpush1.msra.mxu0 %v541
    %571 = vmatprep.subr.mxu0 0.0
    %572 = vmatpush1.msra.mxu0 %v542
    %573 = vmatprep.subr.mxu0 0.0
    %574 = vmatpush1.msra.mxu0 %v543
    %575 = vmatprep.subr.mxu0 0.0
    %576 = vmatpush1.msra.mxu0 %v544
    %577 = vmatprep.subr.mxu0 0.0
    %578 = vmatpush1.msra.mxu0 %v545
    %579 = vmatprep.subr.mxu0 0.0
    %580 = vmatpush1.msra.mxu0 %v546
    %581 = vmatprep.subr.mxu0 0.0
    %582 = vmatpush1.msra.mxu0 %v547
    %583 = vmatprep.subr.mxu0 0.0
    %584 = vmatpush1.msra.mxu0 %v548
    %585 = vmatprep.subr.mxu0 0.0
    %586 = vmatpush1.msra.mxu0 %v549
    %587 = vmatprep.subr.mxu0 0.0
    %588 = vmatpush1.msra.mxu0 %v550
    %589 = vmatprep.subr.mxu0 0.0
    %590 = vmatpush1.msra.mxu0 %v551
    %591 = vmatprep.subr.mxu0 0.0
    %592 = vmatpush1.msra.mxu0 0.0
    %593 = vmatprep.subr.mxu0 0.0
    %594 = vmatpush1.msra.mxu0 0.0
    %595 = vmatprep.subr.mxu0 0.0
    %596 = vmatpush1.msra.mxu0 0.0
    %597 = vmatprep.subr.mxu0 0.0
    %598 = vmatpush1.msra.mxu0 0.0
    %599 = vmatprep.subr.mxu0 0.0
    %600 = vmatpush1.msra.mxu0 0.0
    %601 = vmatprep.subr.mxu0 0.0
    %602 = vmatpush1.msra.mxu0 0.0
    %603 = vmatprep.subr.mxu0 0.0
    %604 = vmatpush1.msra.mxu0 0.0
    %605 = vmatprep.subr.mxu0 0.0
    %606 = vmatpush1.msra.mxu0 0.0
    %607 = vmatprep.subr.mxu0 0.0
    %608 = vmatpush1.msra.mxu0 0.0
    %609 = vmatprep.subr.mxu0 0.0
    %610 = vmatpush1.msra.mxu0 0.0
    %611 = vmatprep.subr.mxu0 0.0
    %612 = vmatpush1.msra.mxu0 0.0
    %613 = vmatprep.subr.mxu0 0.0
    %614 = vmatpush1.msra.mxu0 0.0
    %615 = vmatprep.subr.mxu0 0.0
    %616 = vmatpush1.msra.mxu0 0.0
    %617 = vmatprep.subr.mxu0 0.0
    %618 = vmatpush1.msra.mxu0 0.0
    %619 = vmatprep.subr.mxu0 0.0
    %620 = vmatpush1.msra.mxu0 0.0
    %621 = vmatprep.subr.mxu0 0.0
    %622 = vmatpush1.msra.mxu0 0.0
    %623 = vmatprep.mubr.f32.mxu0 0.0
    %624 = vmatmul.mubr.f32.gmra.mrb[0].mxu0 %v535
    %v625 = vpop.f32.mrb[0].mxu0
    %v626 = vadd.f32 %v557, %v625
    %v627 = vpop.f32.mrb[0].mxu0
    %628 = vdwg.mxu0
    %v629 = vrot.slane %v626, 4
    %v630 = vadd.f32 %v626, %v629
    %v631 = vrot.slane %v630, 2
    %v632 = vadd.f32 %v630, %v631
    %v633 = vrot.slane %v632, 1
    %v634 = vadd.f32 %v632, %v633
    %v635 = vmul.f32 %v634, %v400
    %v636 = vsub.f32 %v626, %v635
    %v637 = vmul.f32 %v636, %v636
    %v638 = vrot.slane %v637, 4
    %v639 = vadd.f32 %v637, %v638
    %v640 = vrot.slane %v639, 2
    %v641 = vadd.f32 %v639, %v640
    %v642 = vrot.slane %v641, 1
    %v643 = vadd.f32 %v641, %v642
    %v644 = vmul.f32 %v643, %v400
    %v645 = vadd.f32 %v644, 1e-05
    %v646 = vrsqrt.pop %v645
    %v647 = vmul.f32 %v636, %v646
    %v648 = vadd.f32 %v418, %v647
    %v649 = vmul.f32 %v648, 0.5
    %v650 = vmul.f32 %v648, 0.70710677
    %v651 = verf.f32.pop %v650
    %v652 = vadd.f32 %v651, 1.0
    %v653 = vmul.f32 %v649, %v652
    %v654 = vld [vmem:[#allocation14] sm:$0xff]
    %v655 = vld [vmem:[#allocation14 + $0x8] sm:$0xff]
    %v656 = vld [vmem:[#allocation14 + $0x10] sm:$0xff]
    %v657 = vld [vmem:[#allocation14 + $0x18] sm:$0xff]
    %v658 = vld [vmem:[#allocation14 + $0x20] sm:$0xff]
    %v659 = vld [vmem:[#allocation14 + $0x28] sm:$0xff]
    %v660 = vld [vmem:[#allocation14 + $0x30] sm:$0xff]
    %v661 = vld [vmem:[#allocation14 + $0x38] sm:$0xff]
    %v662 = vld [vmem:[#allocation14 + $0x40] sm:$0xff]
    %v663 = vld [vmem:[#allocation14 + $0x48] sm:$0xff]
    %v664 = vld [vmem:[#allocation14 + $0x50] sm:$0xff]
    %v665 = vld [vmem:[#allocation14 + $0x58] sm:$0xff]
    %v666 = vld [vmem:[#allocation14 + $0x60] sm:$0xff]
    %v667 = vld [vmem:[#allocation14 + $0x68] sm:$0xff]
    %v668 = vld [vmem:[#allocation14 + $0x70] sm:$0xff]
    %v669 = vld [vmem:[#allocation14 + $0x78] sm:$0xff]
    %v670 = vld [vmem:[#allocation16] sm:$0x1]
    %v672 = vlaneseq
    %v673 = vshrl.u32 %v672, 7
    %v674 = vsub.s32 0, %v673
    %v675 = vrot.slane %v670, %v674
    %677 = vmatprep.subr.mxu0 0.0
    %678 = vmatpush1.msra.mxu0 %v654
    %679 = vmatprep.subr.mxu0 0.0
    %680 = vmatpush1.msra.mxu0 %v655
    %681 = vmatprep.subr.mxu0 0.0
    %682 = vmatpush1.msra.mxu0 %v656
    %683 = vmatprep.subr.mxu0 0.0
    %684 = vmatpush1.msra.mxu0 %v657
    %685 = vmatprep.subr.mxu0 0.0
    %686 = vmatpush1.msra.mxu0 %v658
    %687 = vmatprep.subr.mxu0 0.0
    %688 = vmatpush1.msra.mxu0 %v659
    %689 = vmatprep.subr.mxu0 0.0
    %690 = vmatpush1.msra.mxu0 %v660
    %691 = vmatprep.subr.mxu0 0.0
    %692 = vmatpush1.msra.mxu0 %v661
    %693 = vmatprep.subr.mxu0 0.0
    %694 = vmatpush1.msra.mxu0 %v662
    %695 = vmatprep.subr.mxu0 0.0
    %696 = vmatpush1.msra.mxu0 %v663
    %697 = vmatprep.subr.mxu0 0.0
    %698 = vmatpush1.msra.mxu0 %v664
    %699 = vmatprep.subr.mxu0 0.0
    %700 = vmatpush1.msra.mxu0 %v665
    %701 = vmatprep.subr.mxu0 0.0
    %702 = vmatpush1.msra.mxu0 %v666
    %703 = vmatprep.subr.mxu0 0.0
    %704 = vmatpush1.msra.mxu0 %v667
    %705 = vmatprep.subr.mxu0 0.0
    %706 = vmatpush1.msra.mxu0 %v668
    %707 = vmatprep.subr.mxu0 0.0
    %708 = vmatpush1.msra.mxu0 %v669
    %709 = vmatprep.subr.mxu0 0.0
    %710 = vmatpush1.msra.mxu0 0.0
    %711 = vmatprep.subr.mxu0 0.0
    %712 = vmatpush1.msra.mxu0 0.0
    %713 = vmatprep.subr.mxu0 0.0
    %714 = vmatpush1.msra.mxu0 0.0
    %715 = vmatprep.subr.mxu0 0.0
    %716 = vmatpush1.msra.mxu0 0.0
    %717 = vmatprep.subr.mxu0 0.0
    %718 = vmatpush1.msra.mxu0 0.0
    %719 = vmatprep.subr.mxu0 0.0
    %720 = vmatpush1.msra.mxu0 0.0
    %721 = vmatprep.subr.mxu0 0.0
    %722 = vmatpush1.msra.mxu0 0.0
    %723 = vmatprep.subr.mxu0 0.0
    %724 = vmatpush1.msra.mxu0 0.0
    %725 = vmatprep.subr.mxu0 0.0
    %726 = vmatpush1.msra.mxu0 0.0
    %727 = vmatprep.subr.mxu0 0.0
    %728 = vmatpush1.msra.mxu0 0.0
    %729 = vmatprep.subr.mxu0 0.0
    %730 = vmatpush1.msra.mxu0 0.0
    %731 = vmatprep.subr.mxu0 0.0
    %732 = vmatpush1.msra.mxu0 0.0
    %733 = vmatprep.subr.mxu0 0.0
    %734 = vmatpush1.msra.mxu0 0.0
    %735 = vmatprep.subr.mxu0 0.0
    %736 = vmatpush1.msra.mxu0 0.0
    %737 = vmatprep.subr.mxu0 0.0
    %738 = vmatpush1.msra.mxu0 0.0
    %739 = vmatprep.subr.mxu0 0.0
    %740 = vmatpush1.msra.mxu0 0.0
    %741 = vmatprep.mubr.f32.mxu0 0.0
    %742 = vmatmul.mubr.f32.gmra.mrb[0].mxu0 %v653
    %v743 = vpop.f32.mrb[0].mxu0
    %v744 = vadd.f32 %v675, %v743
    %v745 = vpop.f32.mrb[0].mxu0
    %746 = vdwg.mxu0
    %v747 = vrot.slane %v744, 4
    %v748 = vadd.f32 %v744, %v747
    %v749 = vrot.slane %v748, 2
    %v750 = vadd.f32 %v748, %v749
    %v751 = vrot.slane %v750, 1
    %v752 = vadd.f32 %v750, %v751
    %v753 = vmul.f32 %v752, %v400
    %v754 = vsub.f32 %v744, %v753
    %v755 = vmul.f32 %v754, %v754
    %v756 = vrot.slane %v755, 4
    %v757 = vadd.f32 %v755, %v756
    %v758 = vrot.slane %v757, 2
    %v759 = vadd.f32 %v757, %v758
    %v760 = vrot.slane %v759, 1
    %v761 = vadd.f32 %v759, %v760
    %v762 = vmul.f32 %v761, %v400
    %v763 = vadd.f32 %v762, 1e-05
    %v764 = vrsqrt.pop %v763
    %v765 = vmul.f32 %v754, %v764
    %v766 = vmul.f32 %v765, 0.5
    %v767 = vmul.f32 %v765, 0.70710677
    %v768 = verf.f32.pop %v767
    %v769 = vadd.f32 %v768, 1.0
    %v770 = vmul.f32 %v766, %v769
    %v771 = vld [vmem:[#allocation17] sm:$0xff]
    %v772 = vld [vmem:[#allocation17 + $0x8] sm:$0xff]
    %v773 = vld [vmem:[#allocation17 + $0x10] sm:$0xff]
    %v774 = vld [vmem:[#allocation17 + $0x18] sm:$0xff]
    %v775 = vld [vmem:[#allocation17 + $0x20] sm:$0xff]
    %v776 = vld [vmem:[#allocation17 + $0x28] sm:$0xff]
    %v777 = vld [vmem:[#allocation17 + $0x30] sm:$0xff]
    %v778 = vld [vmem:[#allocation17 + $0x38] sm:$0xff]
    %v779 = vld [vmem:[#allocation17 + $0x40] sm:$0xff]
    %v780 = vld [vmem:[#allocation17 + $0x48] sm:$0xff]
    %v781 = vld [vmem:[#allocation17 + $0x50] sm:$0xff]
    %v782 = vld [vmem:[#allocation17 + $0x58] sm:$0xff]
    %v783 = vld [vmem:[#allocation17 + $0x60] sm:$0xff]
    %v784 = vld [vmem:[#allocation17 + $0x68] sm:$0xff]
    %v785 = vld [vmem:[#allocation17 + $0x70] sm:$0xff]
    %v786 = vld [vmem:[#allocation17 + $0x78] sm:$0xff]
    %v787 = vld [vmem:[#allocation19] sm:$0x1]
    %v789 = vlaneseq
    %v790 = vshrl.u32 %v789, 7
    %v791 = vsub.s32 0, %v790
    %v792 = vrot.slane %v787, %v791
    %794 = vmatprep.subr.mxu0 0.0
    %795 = vmatpush1.msra.mxu0 %v771
    %796 = vmatprep.subr.mxu0 0.0
    %797 = vmatpush1.msra.mxu0 %v772
    %798 = vmatprep.subr.mxu0 0.0
    %799 = vmatpush1.msra.mxu0 %v773
    %800 = vmatprep.subr.mxu0 0.0
    %801 = vmatpush1.msra.mxu0 %v774
    %802 = vmatprep.subr.mxu0 0.0
    %803 = vmatpush1.msra.mxu0 %v775
    %804 = vmatprep.subr.mxu0 0.0
    %805 = vmatpush1.msra.mxu0 %v776
    %806 = vmatprep.subr.mxu0 0.0
    %807 = vmatpush1.msra.mxu0 %v777
    %808 = vmatprep.subr.mxu0 0.0
    %809 = vmatpush1.msra.mxu0 %v778
    %810 = vmatprep.subr.mxu0 0.0
    %811 = vmatpush1.msra.mxu0 %v779
    %812 = vmatprep.subr.mxu0 0.0
    %813 = vmatpush1.msra.mxu0 %v780
    %814 = vmatprep.subr.mxu0 0.0
    %815 = vmatpush1.msra.mxu0 %v781
    %816 = vmatprep.subr.mxu0 0.0
    %817 = vmatpush1.msra.mxu0 %v782
    %818 = vmatprep.subr.mxu0 0.0
    %819 = vmatpush1.msra.mxu0 %v783
    %820 = vmatprep.subr.mxu0 0.0
    %821 = vmatpush1.msra.mxu0 %v784
    %822 = vmatprep.subr.mxu0 0.0
    %823 = vmatpush1.msra.mxu0 %v785
    %824 = vmatprep.subr.mxu0 0.0
    %825 = vmatpush1.msra.mxu0 %v786
    %826 = vmatprep.subr.mxu0 0.0
    %827 = vmatpush1.msra.mxu0 0.0
    %828 = vmatprep.subr.mxu0 0.0
    %829 = vmatpush1.msra.mxu0 0.0
    %830 = vmatprep.subr.mxu0 0.0
    %831 = vmatpush1.msra.mxu0 0.0
    %832 = vmatprep.subr.mxu0 0.0
    %833 = vmatpush1.msra.mxu0 0.0
    %834 = vmatprep.subr.mxu0 0.0
    %835 = vmatpush1.msra.mxu0 0.0
    %836 = vmatprep.subr.mxu0 0.0
    %837 = vmatpush1.msra.mxu0 0.0
    %838 = vmatprep.subr.mxu0 0.0
    %839 = vmatpush1.msra.mxu0 0.0
    %840 = vmatprep.subr.mxu0 0.0
    %841 = vmatpush1.msra.mxu0 0.0
    %842 = vmatprep.subr.mxu0 0.0
    %843 = vmatpush1.msra.mxu0 0.0
    %844 = vmatprep.subr.mxu0 0.0
    %845 = vmatpush1.msra.mxu0 0.0
    %846 = vmatprep.subr.mxu0 0.0
    %847 = vmatpush1.msra.mxu0 0.0
    %848 = vmatprep.subr.mxu0 0.0
    %849 = vmatpush1.msra.mxu0 0.0
    %850 = vmatprep.subr.mxu0 0.0
    %851 = vmatpush1.msra.mxu0 0.0
    %852 = vmatprep.subr.mxu0 0.0
    %853 = vmatpush1.msra.mxu0 0.0
    %854 = vmatprep.subr.mxu0 0.0
    %855 = vmatpush1.msra.mxu0 0.0
    %856 = vmatprep.subr.mxu0 0.0
    %857 = vmatpush1.msra.mxu0 0.0
    %858 = vmatprep.mubr.f32.mxu0 0.0
    %859 = vmatmul.mubr.f32.gmra.mrb[0].mxu0 %v770
    %v860 = vpop.f32.mrb[0].mxu0
    %v861 = vadd.f32 %v792, %v860
    %v862 = vpop.f32.mrb[0].mxu0
    %863 = vdwg.mxu0
    %v864 = vrot.slane %v861, 4
    %v865 = vadd.f32 %v861, %v864
    %v866 = vrot.slane %v865, 2
    %v867 = vadd.f32 %v865, %v866
    %v868 = vrot.slane %v867, 1
    %v869 = vadd.f32 %v867, %v868
    %v870 = vmul.f32 %v869, %v400
    %v871 = vsub.f32 %v861, %v870
    %v872 = vmul.f32 %v871, %v871
    %v873 = vrot.slane %v872, 4
    %v874 = vadd.f32 %v872, %v873
    %v875 = vrot.slane %v874, 2
    %v876 = vadd.f32 %v874, %v875
    %v877 = vrot.slane %v876, 1
    %v878 = vadd.f32 %v876, %v877
    %v879 = vmul.f32 %v878, %v400
    %v880 = vadd.f32 %v879, 1e-05
    %v881 = vrsqrt.pop %v880
    %v882 = vmul.f32 %v871, %v881
    %v883 = vadd.f32 %v653, %v882
    %v884 = vmul.f32 %v883, 0.5
    %v885 = vmul.f32 %v883, 0.70710677
    %v886 = verf.f32.pop %v885
    %v887 = vadd.f32 %v886, 1.0
    %v888 = vmul.f32 %v884, %v887
    %v889 = vld [vmem:[#allocation20] sm:$0xff]
    %v890 = vld [vmem:[#allocation20 + $0x8] sm:$0xff]
    %v891 = vld [vmem:[#allocation20 + $0x10] sm:$0xff]
    %v892 = vld [vmem:[#allocation20 + $0x18] sm:$0xff]
    %v893 = vld [vmem:[#allocation20 + $0x20] sm:$0xff]
    %v894 = vld [vmem:[#allocation20 + $0x28] sm:$0xff]
    %v895 = vld [vmem:[#allocation20 + $0x30] sm:$0xff]
    %v896 = vld [vmem:[#allocation20 + $0x38] sm:$0xff]
    %v897 = vld [vmem:[#allocation20 + $0x40] sm:$0xff]
    %v898 = vld [vmem:[#allocation20 + $0x48] sm:$0xff]
    %v899 = vld [vmem:[#allocation20 + $0x50] sm:$0xff]
    %v900 = vld [vmem:[#allocation20 + $0x58] sm:$0xff]
    %v901 = vld [vmem:[#allocation20 + $0x60] sm:$0xff]
    %v902 = vld [vmem:[#allocation20 + $0x68] sm:$0xff]
    %v903 = vld [vmem:[#allocation20 + $0x70] sm:$0xff]
    %v904 = vld [vmem:[#allocation20 + $0x78] sm:$0xff]
    %v905 = vld [vmem:[#allocation22] sm:$0x1]
    %v907 = vlaneseq
    %v908 = vshrl.u32 %v907, 7
    %v909 = vsub.s32 0, %v908
    %v910 = vrot.slane %v905, %v909
    %912 = vmatprep.subr.mxu0 0.0
    %913 = vmatpush1.msra.mxu0 %v889
    %914 = vmatprep.subr.mxu0 0.0
    %915 = vmatpush1.msra.mxu0 %v890
    %916 = vmatprep.subr.mxu0 0.0
    %917 = vmatpush1.msra.mxu0 %v891
    %918 = vmatprep.subr.mxu0 0.0
    %919 = vmatpush1.msra.mxu0 %v892
    %920 = vmatprep.subr.mxu0 0.0
    %921 = vmatpush1.msra.mxu0 %v893
    %922 = vmatprep.subr.mxu0 0.0
    %923 = vmatpush1.msra.mxu0 %v894
    %924 = vmatprep.subr.mxu0 0.0
    %925 = vmatpush1.msra.mxu0 %v895
    %926 = vmatprep.subr.mxu0 0.0
    %927 = vmatpush1.msra.mxu0 %v896
    %928 = vmatprep.subr.mxu0 0.0
    %929 = vmatpush1.msra.mxu0 %v897
    %930 = vmatprep.subr.mxu0 0.0
    %931 = vmatpush1.msra.mxu0 %v898
    %932 = vmatprep.subr.mxu0 0.0
    %933 = vmatpush1.msra.mxu0 %v899
    %934 = vmatprep.subr.mxu0 0.0
    %935 = vmatpush1.msra.mxu0 %v900
    %936 = vmatprep.subr.mxu0 0.0
    %937 = vmatpush1.msra.mxu0 %v901
    %938 = vmatprep.subr.mxu0 0.0
    %939 = vmatpush1.msra.mxu0 %v902
    %940 = vmatprep.subr.mxu0 0.0
    %941 = vmatpush1.msra.mxu0 %v903
    %942 = vmatprep.subr.mxu0 0.0
    %943 = vmatpush1.msra.mxu0 %v904
    %944 = vmatprep.subr.mxu0 0.0
    %945 = vmatpush1.msra.mxu0 0.0
    %946 = vmatprep.subr.mxu0 0.0
    %947 = vmatpush1.msra.mxu0 0.0
    %948 = vmatprep.subr.mxu0 0.0
    %949 = vmatpush1.msra.mxu0 0.0
    %950 = vmatprep.subr.mxu0 0.0
    %951 = vmatpush1.msra.mxu0 0.0
    %952 = vmatprep.subr.mxu0 0.0
    %953 = vmatpush1.msra.mxu0 0.0
    %954 = vmatprep.subr.mxu0 0.0
    %955 = vmatpush1.msra.mxu0 0.0
    %956 = vmatprep.subr.mxu0 0.0
    %957 = vmatpush1.msra.mxu0 0.0
    %958 = vmatprep.subr.mxu0 0.0
    %959 = vmatpush1.msra.mxu0 0.0
    %960 = vmatprep.subr.mxu0 0.0
    %961 = vmatpush1.msra.mxu0 0.0
    %962 = vmatprep.subr.mxu0 0.0
    %963 = vmatpush1.msra.mxu0 0.0
    %964 = vmatprep.subr.mxu0 0.0
    %965 = vmatpush1.msra.mxu0 0.0
    %966 = vmatprep.subr.mxu0 0.0
    %967 = vmatpush1.msra.mxu0 0.0
    %968 = vmatprep.subr.mxu0 0.0
    %969 = vmatpush1.msra.mxu0 0.0
    %970 = vmatprep.subr.mxu0 0.0
    %971 = vmatpush1.msra.mxu0 0.0
    %972 = vmatprep.subr.mxu0 0.0
    %973 = vmatpush1.msra.mxu0 0.0
    %974 = vmatprep.subr.mxu0 0.0
    %975 = vmatpush1.msra.mxu0 0.0
    %976 = vmatprep.mubr.f32.mxu0 0.0
    %977 = vmatmul.mubr.f32.gmra.mrb[0].mxu0 %v888
    %v978 = vpop.f32.mrb[0].mxu0
    %v979 = vadd.f32 %v910, %v978
    %v980 = vpop.f32.mrb[0].mxu0
    %981 = vdwg.mxu0
    %v982 = vrot.slane %v979, 4
    %v983 = vadd.f32 %v979, %v982
    %v984 = vrot.slane %v983, 2
    %v985 = vadd.f32 %v983, %v984
    %v986 = vrot.slane %v985, 1
    %v987 = vadd.f32 %v985, %v986
    %v988 = vmul.f32 %v987, %v400
    %v989 = vsub.f32 %v979, %v988
    %v990 = vmul.f32 %v989, %v989
    %v991 = vrot.slane %v990, 4
    %v992 = vadd.f32 %v990, %v991
    %v993 = vrot.slane %v992, 2
    %v994 = vadd.f32 %v992, %v993
    %v995 = vrot.slane %v994, 1
    %v996 = vadd.f32 %v994, %v995
    %v997 = vmul.f32 %v996, %v400
    %v998 = vadd.f32 %v997, 1e-05
    %v999 = vrsqrt.pop %v998
    %v1000 = vmul.f32 %v989, %v999
    %v1001 = vmul.f32 %v1000, 0.5
    %v1002 = vmul.f32 %v1000, 0.70710677
    %v1003 = verf.f32.pop %v1002
    %v1004 = vadd.f32 %v1003, 1.0
    %v1005 = vmul.f32 %v1001, %v1004
    %v1006 = vld [vmem:[#allocation23] sm:$0xff]
    %v1007 = vld [vmem:[#allocation23 + $0x8] sm:$0xff]
    %v1008 = vld [vmem:[#allocation23 + $0x10] sm:$0xff]
    %v1009 = vld [vmem:[#allocation23 + $0x18] sm:$0xff]
    %v1010 = vld [vmem:[#allocation23 + $0x20] sm:$0xff]
    %v1011 = vld [vmem:[#allocation23 + $0x28] sm:$0xff]
    %v1012 = vld [vmem:[#allocation23 + $0x30] sm:$0xff]
    %v1013 = vld [vmem:[#allocation23 + $0x38] sm:$0xff]
    %v1014 = vld [vmem:[#allocation23 + $0x40] sm:$0xff]
    %v1015 = vld [vmem:[#allocation23 + $0x48] sm:$0xff]
    %v1016 = vld [vmem:[#allocation23 + $0x50] sm:$0xff]
    %v1017 = vld [vmem:[#allocation23 + $0x58] sm:$0xff]
    %v1018 = vld [vmem:[#allocation23 + $0x60] sm:$0xff]
    %v1019 = vld [vmem:[#allocation23 + $0x68] sm:$0xff]
    %v1020 = vld [vmem:[#allocation23 + $0x70] sm:$0xff]
    %v1021 = vld [vmem:[#allocation23 + $0x78] sm:$0xff]
    %v1022 = vld [vmem:[#allocation25] sm:$0x1]
    %v1024 = vlaneseq
    %v1025 = vshrl.u32 %v1024, 7
    %v1026 = vsub.s32 0, %v1025
    %v1027 = vrot.slane %v1022, %v1026
    %1029 = vmatprep.subr.mxu0 0.0
    %1030 = vmatpush1.msra.mxu0 %v1006
    %1031 = vmatprep.subr.mxu0 0.0
    %1032 = vmatpush1.msra.mxu0 %v1007
    %1033 = vmatprep.subr.mxu0 0.0
    %1034 = vmatpush1.msra.mxu0 %v1008
    %1035 = vmatprep.subr.mxu0 0.0
    %1036 = vmatpush1.msra.mxu0 %v1009
    %1037 = vmatprep.subr.mxu0 0.0
    %1038 = vmatpush1.msra.mxu0 %v1010
    %1039 = vmatprep.subr.mxu0 0.0
    %1040 = vmatpush1.msra.mxu0 %v1011
    %1041 = vmatprep.subr.mxu0 0.0
    %1042 = vmatpush1.msra.mxu0 %v1012
    %1043 = vmatprep.subr.mxu0 0.0
    %1044 = vmatpush1.msra.mxu0 %v1013
    %1045 = vmatprep.subr.mxu0 0.0
    %1046 = vmatpush1.msra.mxu0 %v1014
    %1047 = vmatprep.subr.mxu0 0.0
    %1048 = vmatpush1.msra.mxu0 %v1015
    %1049 = vmatprep.subr.mxu0 0.0
    %1050 = vmatpush1.msra.mxu0 %v1016
    %1051 = vmatprep.subr.mxu0 0.0
    %1052 = vmatpush1.msra.mxu0 %v1017
    %1053 = vmatprep.subr.mxu0 0.0
    %1054 = vmatpush1.msra.mxu0 %v1018
    %1055 = vmatprep.subr.mxu0 0.0
    %1056 = vmatpush1.msra.mxu0 %v1019
    %1057 = vmatprep.subr.mxu0 0.0
    %1058 = vmatpush1.msra.mxu0 %v1020
    %1059 = vmatprep.subr.mxu0 0.0
    %1060 = vmatpush1.msra.mxu0 %v1021
    %1061 = vmatprep.subr.mxu0 0.0
    %1062 = vmatpush1.msra.mxu0 0.0
    %1063 = vmatprep.subr.mxu0 0.0
    %1064 = vmatpush1.msra.mxu0 0.0
    %1065 = vmatprep.subr.mxu0 0.0
    %1066 = vmatpush1.msra.mxu0 0.0
    %1067 = vmatprep.subr.mxu0 0.0
    %1068 = vmatpush1.msra.mxu0 0.0
    %1069 = vmatprep.subr.mxu0 0.0
    %1070 = vmatpush1.msra.mxu0 0.0
    %1071 = vmatprep.subr.mxu0 0.0
    %1072 = vmatpush1.msra.mxu0 0.0
    %1073 = vmatprep.subr.mxu0 0.0
    %1074 = vmatpush1.msra.mxu0 0.0
    %1075 = vmatprep.subr.mxu0 0.0
    %1076 = vmatpush1.msra.mxu0 0.0
    %1077 = vmatprep.subr.mxu0 0.0
    %1078 = vmatpush1.msra.mxu0 0.0
    %1079 = vmatprep.subr.mxu0 0.0
    %1080 = vmatpush1.msra.mxu0 0.0
    %1081 = vmatprep.subr.mxu0 0.0
    %1082 = vmatpush1.msra.mxu0 0.0
    %1083 = vmatprep.subr.mxu0 0.0
    %1084 = vmatpush1.msra.mxu0 0.0
    %1085 = vmatprep.subr.mxu0 0.0
    %1086 = vmatpush1.msra.mxu0 0.0
    %1087 = vmatprep.subr.mxu0 0.0
    %1088 = vmatpush1.msra.mxu0 0.0
    %1089 = vmatprep.subr.mxu0 0.0
    %1090 = vmatpush1.msra.mxu0 0.0
    %1091 = vmatprep.subr.mxu0 0.0
    %1092 = vmatpush1.msra.mxu0 0.0
    %1093 = vmatprep.mubr.f32.mxu0 0.0
    %1094 = vmatmul.mubr.f32.gmra.mrb[0].mxu0 %v1005
    %v1095 = vpop.f32.mrb[0].mxu0
    %v1096 = vadd.f32 %v1027, %v1095
    %v1097 = vpop.f32.mrb[0].mxu0
    %1098 = vdwg.mxu0
    %v1099 = vrot.slane %v1096, 4
    %v1100 = vadd.f32 %v1096, %v1099
    %v1101 = vrot.slane %v1100, 2
    %v1102 = vadd.f32 %v1100, %v1101
    %v1103 = vrot.slane %v1102, 1
    %v1104 = vadd.f32 %v1102, %v1103
    %v1105 = vmul.f32 %v1104, %v400
    %v1106 = vsub.f32 %v1096, %v1105
    %v1107 = vmul.f32 %v1106, %v1106
    %v1108 = vrot.slane %v1107, 4
    %v1109 = vadd.f32 %v1107, %v1108
    %v1110 = vrot.slane %v1109, 2
    %v1111 = vadd.f32 %v1109, %v1110
    %v1112 = vrot.slane %v1111, 1
    %v1113 = vadd.f32 %v1111, %v1112
    %v1114 = vmul.f32 %v1113, %v400
    %v1115 = vadd.f32 %v1114, 1e-05
    %v1116 = vrsqrt.pop %v1115
    %v1117 = vmul.f32 %v1106, %v1116
    %v1118 = vadd.f32 %v888, %v1117
    %v1119 = vmul.f32 %v1118, 0.5
    %v1120 = vmul.f32 %v1118, 0.70710677
    %v1121 = verf.f32.pop %v1120
    %v1122 = vadd.f32 %v1121, 1.0
    %v1123 = vmul.f32 %v1119, %v1122
    %v1124 = vld [vmem:[#allocation26] sm:$0xff]
    %v1125 = vld [vmem:[#allocation26 + $0x8] sm:$0xff]
    %v1126 = vld [vmem:[#allocation26 + $0x10] sm:$0xff]
    %v1127 = vld [vmem:[#allocation26 + $0x18] sm:$0xff]
    %v1128 = vld [vmem:[#allocation26 + $0x20] sm:$0xff]
    %v1129 = vld [vmem:[#allocation26 + $0x28] sm:$0xff]
    %v1130 = vld [vmem:[#allocation26 + $0x30] sm:$0xff]
    %v1131 = vld [vmem:[#allocation26 + $0x38] sm:$0xff]
    %v1132 = vld [vmem:[#allocation26 + $0x40] sm:$0xff]
    %v1133 = vld [vmem:[#allocation26 + $0x48] sm:$0xff]
    %v1134 = vld [vmem:[#allocation26 + $0x50] sm:$0xff]
    %v1135 = vld [vmem:[#allocation26 + $0x58] sm:$0xff]
    %v1136 = vld [vmem:[#allocation26 + $0x60] sm:$0xff]
    %v1137 = vld [vmem:[#allocation26 + $0x68] sm:$0xff]
    %v1138 = vld [vmem:[#allocation26 + $0x70] sm:$0xff]
    %v1139 = vld [vmem:[#allocation26 + $0x78] sm:$0xff]
    %v1140 = vld [vmem:[#allocation28] sm:$0x1]
    %v1142 = vlaneseq
    %v1143 = vshrl.u32 %v1142, 7
    %v1144 = vsub.s32 0, %v1143
    %v1145 = vrot.slane %v1140, %v1144
    %1147 = vmatprep.subr.mxu0 0.0
    %1148 = vmatpush1.msra.mxu0 %v1124
    %1149 = vmatprep.subr.mxu0 0.0
    %1150 = vmatpush1.msra.mxu0 %v1125
    %1151 = vmatprep.subr.mxu0 0.0
    %1152 = vmatpush1.msra.mxu0 %v1126
    %1153 = vmatprep.subr.mxu0 0.0
    %1154 = vmatpush1.msra.mxu0 %v1127
    %1155 = vmatprep.subr.mxu0 0.0
    %1156 = vmatpush1.msra.mxu0 %v1128
    %1157 = vmatprep.subr.mxu0 0.0
    %1158 = vmatpush1.msra.mxu0 %v1129
    %1159 = vmatprep.subr.mxu0 0.0
    %1160 = vmatpush1.msra.mxu0 %v1130
    %1161 = vmatprep.subr.mxu0 0.0
    %1162 = vmatpush1.msra.mxu0 %v1131
    %1163 = vmatprep.subr.mxu0 0.0
    %1164 = vmatpush1.msra.mxu0 %v1132
    %1165 = vmatprep.subr.mxu0 0.0
    %1166 = vmatpush1.msra.mxu0 %v1133
    %1167 = vmatprep.subr.mxu0 0.0
    %1168 = vmatpush1.msra.mxu0 %v1134
    %1169 = vmatprep.subr.mxu0 0.0
    %1170 = vmatpush1.msra.mxu0 %v1135
    %1171 = vmatprep.subr.mxu0 0.0
    %1172 = vmatpush1.msra.mxu0 %v1136
    %1173 = vmatprep.subr.mxu0 0.0
    %1174 = vmatpush1.msra.mxu0 %v1137
    %1175 = vmatprep.subr.mxu0 0.0
    %1176 = vmatpush1.msra.mxu0 %v1138
    %1177 = vmatprep.subr.mxu0 0.0
    %1178 = vmatpush1.msra.mxu0 %v1139
    %1179 = vmatprep.subr.mxu0 0.0
    %1180 = vmatpush1.msra.mxu0 0.0
    %1181 = vmatprep.subr.mxu0 0.0
    %1182 = vmatpush1.msra.mxu0 0.0
    %1183 = vmatprep.subr.mxu0 0.0
    %1184 = vmatpush1.msra.mxu0 0.0
    %1185 = vmatprep.subr.mxu0 0.0
    %1186 = vmatpush1.msra.mxu0 0.0
    %1187 = vmatprep.subr.mxu0 0.0
    %1188 = vmatpush1.msra.mxu0 0.0
    %1189 = vmatprep.subr.mxu0 0.0
    %1190 = vmatpush1.msra.mxu0 0.0
    %1191 = vmatprep.subr.mxu0 0.0
    %1192 = vmatpush1.msra.mxu0 0.0
    %1193 = vmatprep.subr.mxu0 0.0
    %1194 = vmatpush1.msra.mxu0 0.0
    %1195 = vmatprep.subr.mxu0 0.0
    %1196 = vmatpush1.msra.mxu0 0.0
    %1197 = vmatprep.subr.mxu0 0.0
    %1198 = vmatpush1.msra.mxu0 0.0
    %1199 = vmatprep.subr.mxu0 0.0
    %1200 = vmatpush1.msra.mxu0 0.0
    %1201 = vmatprep.subr.mxu0 0.0
    %1202 = vmatpush1.msra.mxu0 0.0
    %1203 = vmatprep.subr.mxu0 0.0
    %1204 = vmatpush1.msra.mxu0 0.0
    %1205 = vmatprep.subr.mxu0 0.0
    %1206 = vmatpush1.msra.mxu0 0.0
    %1207 = vmatprep.subr.mxu0 0.0
    %1208 = vmatpush1.msra.mxu0 0.0
    %1209 = vmatprep.subr.mxu0 0.0
    %1210 = vmatpush1.msra.mxu0 0.0
    %1211 = vmatprep.mubr.f32.mxu0 0.0
    %1212 = vmatmul.mubr.f32.gmra.mrb[0].mxu0 %v1123
    %v1213 = vpop.f32.mrb[0].mxu0
    %v1214 = vadd.f32 %v1145, %v1213
    %v1215 = vpop.f32.mrb[0].mxu0
    %1216 = vdwg.mxu0
    %v1217 = vrot.slane %v1214, 4
    %v1218 = vadd.f32 %v1214, %v1217
    %v1219 = vrot.slane %v1218, 2
    %v1220 = vadd.f32 %v1218, %v1219
    %v1221 = vrot.slane %v1220, 1
    %v1222 = vadd.f32 %v1220, %v1221
    %v1223 = vmul.f32 %v1222, %v400
    %v1224 = vsub.f32 %v1214, %v1223
    %v1225 = vmul.f32 %v1224, %v1224
    %v1226 = vrot.slane %v1225, 4
    %v1227 = vadd.f32 %v1225, %v1226
    %v1228 = vrot.slane %v1227, 2
    %v1229 = vadd.f32 %v1227, %v1228
    %v1230 = vrot.slane %v1229, 1
    %v1231 = vadd.f32 %v1229, %v1230
    %v1232 = vmul.f32 %v1231, %v400
    %v1233 = vadd.f32 %v1232, 1e-05
    %v1234 = vrsqrt.pop %v1233
    %v1235 = vmul.f32 %v1224, %v1234
    %v1236 = vmul.f32 %v1235, 0.5
    %v1237 = vmul.f32 %v1235, 0.70710677
    %v1238 = verf.f32.pop %v1237
    %v1239 = vadd.f32 %v1238, 1.0
    %v1240 = vmul.f32 %v1236, %v1239
    %v1241 = vld [vmem:[#allocation29] sm:$0xff]
    %v1242 = vld [vmem:[#allocation29 + $0x8] sm:$0xff]
    %v1243 = vld [vmem:[#allocation29 + $0x10] sm:$0xff]
    %v1244 = vld [vmem:[#allocation29 + $0x18] sm:$0xff]
    %v1245 = vld [vmem:[#allocation29 + $0x20] sm:$0xff]
    %v1246 = vld [vmem:[#allocation29 + $0x28] sm:$0xff]
    %v1247 = vld [vmem:[#allocation29 + $0x30] sm:$0xff]
    %v1248 = vld [vmem:[#allocation29 + $0x38] sm:$0xff]
    %v1249 = vld [vmem:[#allocation29 + $0x40] sm:$0xff]
    %v1250 = vld [vmem:[#allocation29 + $0x48] sm:$0xff]
    %v1251 = vld [vmem:[#allocation29 + $0x50] sm:$0xff]
    %v1252 = vld [vmem:[#allocation29 + $0x58] sm:$0xff]
    %v1253 = vld [vmem:[#allocation29 + $0x60] sm:$0xff]
    %v1254 = vld [vmem:[#allocation29 + $0x68] sm:$0xff]
    %v1255 = vld [vmem:[#allocation29 + $0x70] sm:$0xff]
    %v1256 = vld [vmem:[#allocation29 + $0x78] sm:$0xff]
    %v1257 = vld [vmem:[#allocation31] sm:$0x1]
    %v1259 = vlaneseq
    %v1260 = vshrl.u32 %v1259, 7
    %v1261 = vsub.s32 0, %v1260
    %v1262 = vrot.slane %v1257, %v1261
    %1264 = vmatprep.subr.mxu0 0.0
    %1265 = vmatpush1.msra.mxu0 %v1241
    %1266 = vmatprep.subr.mxu0 0.0
    %1267 = vmatpush1.msra.mxu0 %v1242
    %1268 = vmatprep.subr.mxu0 0.0
    %1269 = vmatpush1.msra.mxu0 %v1243
    %1270 = vmatprep.subr.mxu0 0.0
    %1271 = vmatpush1.msra.mxu0 %v1244
    %1272 = vmatprep.subr.mxu0 0.0
    %1273 = vmatpush1.msra.mxu0 %v1245
    %1274 = vmatprep.subr.mxu0 0.0
    %1275 = vmatpush1.msra.mxu0 %v1246
    %1276 = vmatprep.subr.mxu0 0.0
    %1277 = vmatpush1.msra.mxu0 %v1247
    %1278 = vmatprep.subr.mxu0 0.0
    %1279 = vmatpush1.msra.mxu0 %v1248
    %1280 = vmatprep.subr.mxu0 0.0
    %1281 = vmatpush1.msra.mxu0 %v1249
    %1282 = vmatprep.subr.mxu0 0.0
    %1283 = vmatpush1.msra.mxu0 %v1250
    %1284 = vmatprep.subr.mxu0 0.0
    %1285 = vmatpush1.msra.mxu0 %v1251
    %1286 = vmatprep.subr.mxu0 0.0
    %1287 = vmatpush1.msra.mxu0 %v1252
    %1288 = vmatprep.subr.mxu0 0.0
    %1289 = vmatpush1.msra.mxu0 %v1253
    %1290 = vmatprep.subr.mxu0 0.0
    %1291 = vmatpush1.msra.mxu0 %v1254
    %1292 = vmatprep.subr.mxu0 0.0
    %1293 = vmatpush1.msra.mxu0 %v1255
    %1294 = vmatprep.subr.mxu0 0.0
    %1295 = vmatpush1.msra.mxu0 %v1256
    %1296 = vmatprep.subr.mxu0 0.0
    %1297 = vmatpush1.msra.mxu0 0.0
    %1298 = vmatprep.subr.mxu0 0.0
    %1299 = vmatpush1.msra.mxu0 0.0
    %1300 = vmatprep.subr.mxu0 0.0
    %1301 = vmatpush1.msra.mxu0 0.0
    %1302 = vmatprep.subr.mxu0 0.0
    %1303 = vmatpush1.msra.mxu0 0.0
    %1304 = vmatprep.subr.mxu0 0.0
    %1305 = vmatpush1.msra.mxu0 0.0
    %1306 = vmatprep.subr.mxu0 0.0
    %1307 = vmatpush1.msra.mxu0 0.0
    %1308 = vmatprep.subr.mxu0 0.0
    %1309 = vmatpush1.msra.mxu0 0.0
    %1310 = vmatprep.subr.mxu0 0.0
    %1311 = vmatpush1.msra.mxu0 0.0
    %1312 = vmatprep.subr.mxu0 0.0
    %1313 = vmatpush1.msra.mxu0 0.0
    %1314 = vmatprep.subr.mxu0 0.0
    %1315 = vmatpush1.msra.mxu0 0.0
    %1316 = vmatprep.subr.mxu0 0.0
    %1317 = vmatpush1.msra.mxu0 0.0
    %1318 = vmatprep.subr.mxu0 0.0
    %1319 = vmatpush1.msra.mxu0 0.0
    %1320 = vmatprep.subr.mxu0 0.0
    %1321 = vmatpush1.msra.mxu0 0.0
    %1322 = vmatprep.subr.mxu0 0.0
    %1323 = vmatpush1.msra.mxu0 0.0
    %1324 = vmatprep.subr.mxu0 0.0
    %1325 = vmatpush1.msra.mxu0 0.0
    %1326 = vmatprep.subr.mxu0 0.0
    %1327 = vmatpush1.msra.mxu0 0.0
    %1328 = vmatprep.mubr.f32.mxu0 0.0
    %1329 = vmatmul.mubr.f32.gmra.mrb[0].mxu0 %v1240
    %v1330 = vpop.f32.mrb[0].mxu0
    %v1331 = vadd.f32 %v1262, %v1330
    %v1332 = vpop.f32.mrb[0].mxu0
    %1333 = vdwg.mxu0
    %1334 = vst [vmem:[#allocation32] sm:$0xff] %v1331
    // Predicated region
    $region154: #{improved_dnn_forward.1} parent=1 // pred_check
      _
    $region155: #{improved_dnn_forward.1} parent=1 // pred_check_branch
      %1336 = sbr.rel (0) target = $region157
    $region156: #{improved_dnn_forward.1} parent=1 // pred_region
      %s1338 = ssub.s32 128, 128
      %1339 = vsyncadd [#allocation4], %s1338
      %s1341 = sshll.u32 [#allocation32], 4
      %s1342 = int_to_ptr.vmem [resolvable:$true] %s1341
      %1344 = dma.vmem_to_hbm [thread:$0]  %s1342, 128, %s19, [#allocation4]
    $region157: #{improved_dnn_forward.1} parent=1 // pred_fallthru
      _
    // Predicated region
    $region158: #{improved_dnn_forward.1} parent=1 // pred_check
      _
    $region159: #{improved_dnn_forward.1} parent=1 // pred_check_branch
      %1346 = sbr.rel (0) target = $region161
    $region160: #{improved_dnn_forward.1} parent=1 // pred_region
      %1347 = dma.done [#allocation4], 128
    $region161: #{improved_dnn_forward.1} parent=1 // pred_fallthru
      _
    %1348 = vsyncpa [#allocation3], 1
    %1349 = vsyncpa [#allocation6], 1
    %1350 = vsyncpa [#allocation9], 1
    %1351 = vsyncpa [#allocation12], 1
    %1352 = vsyncpa [#allocation15], 1
    %1353 = vsyncpa [#allocation18], 1
    %1354 = vsyncpa [#allocation21], 1
    %1355 = vsyncpa [#allocation24], 1
    %1356 = vsyncpa [#allocation27], 1
    %1357 = vsyncpa [#allocation30], 1
    %1358 = vsyncpa [#allocation4], 1

</llo_original>
